<compile_context>
chip_gen: v5e
topology: v5e:2x2
jax: 0.10.0
libtpu: 0.0.40
codegen_flags: <defaults>
</compile_context>

<pallas_src>
import jax
import jax.numpy as jnp
from jax.experimental import pallas as pl
from jax.experimental.pallas import tpu as pltpu

BN_EPS = 1e-5
_VMEM_STEP_BUDGET = 8 * 1024 * 1024    # target per-grid-step footprint
_VMEM_LIMIT = 32 * 1024 * 1024         # scoped VMEM limit (safe on v5e/v6e/v7x)


def _round_up(x, m):
    return (x + m - 1) // m * m


def _stats_kernel(lhs_ref, w_ref, sum_ref, sq_ref):
    """Pass 1: accumulate per-channel sum(y), sum(y*y) of the pre-BN conv output.

    lhs_ref : (nb*4*m2p, 9*Cin) bf16 im2col block (pool-position-major rows).
    w_ref   : (9*Cin, Cpad)     bf16 folded conv weights (VMEM-resident).
    sum/sq  : (1, 8, Cpad) f32 accumulators (8 sublane partial sums, reduced in the
              wrapper), revisited across the inner ("arbitrary") grid axis.
    """
    @pl.when(pl.program_id(1) == 0)
    def _init():
        sum_ref[...] = jnp.zeros_like(sum_ref)
        sq_ref[...] = jnp.zeros_like(sq_ref)

    cpad = sum_ref.shape[-1]
    z = jnp.dot(lhs_ref[...], w_ref[...],
                preferred_element_type=jnp.float32)       # (M, Cpad) f32, K = 9*Cin
    zr = z.reshape(-1, 8, cpad)                           # M % 8 == 0 by construction
    sum_ref[...] += jnp.sum(zr, axis=0)[None]
    sq_ref[...] += jnp.sum(zr * zr, axis=0)[None]


def _finish_kernel(lhs_ref, w_ref, scale_ref, shift_ref, o_ref):
    """Pass 2: conv (recomputed) -> folded BN -> ReLU -> 2x2 max-pool -> bf16 store."""
    nb, m2p, cpad = o_ref.shape
    z = jnp.dot(lhs_ref[...], w_ref[...],
                preferred_element_type=jnp.float32)       # (nb*4*m2p, Cpad) f32
    z = jnp.maximum(z * scale_ref[...] + shift_ref[...], 0.0)   # BN + ReLU
    z = z.reshape(nb, 4, m2p, cpad)                       # m2p % 8 == 0 -> aligned split
    o_ref[...] = jnp.max(z, axis=1).astype(o_ref.dtype)   # max over the 4 pool positions


def block_forward(x_nchw, conv_w_oihw, gamma, beta, *, compute_dtype=jnp.bfloat16):
    """Forward of Block. x: (N, Cin, H, W) f32, conv_w: (Cout, Cin, 3, 3). Returns NCHW f32."""
    n, cin, h, w = x_nchw.shape
    cout = conv_w_oihw.shape[0]
    assert h % 2 == 0 and w % 2 == 0, "MaxPool2d(2) needs even spatial dims"

    h2, w2 = h // 2, w // 2
    m2 = h2 * w2
    m2p = _round_up(m2, 16)       # bf16 sublane tile -> all reshapes stay tile-aligned
    k = 9 * cin                   # folded contraction dim (9 taps x Cin)
    # NOTE: for Cout > 128 pad to a multiple of 256 on v6e/v7x to fill the MXU columns.
    cpad = _round_up(cout, 128)   # lane-dense output channels (unmasked vst)

    # ---- images per grid step from an explicit per-step VMEM budget ---------------
    fixed = 2 * k * cpad * 2 + 2 * 2 * cpad * 4              # weights + scale/shift (x2 bufs)
    per_img = (2 * 4 * m2p * k * 2                           # double-buffered bf16 LHS block
               + 4 * m2p * cpad * 4                          # f32 conv intermediate
               + 2 * m2p * cpad * 2)                         # double-buffered bf16 out block
    nb = int(max(1, min(n, (_VMEM_STEP_BUDGET - fixed) // per_img)))
    n_blocks = -(-n // nb)
    n_pad = n_blocks * nb         # zero-padded images: conv output 0 -> BN sums unaffected
    # v7x megacore: split the stats reduction over two "parallel" groups when possible.
    g_split = 2 if (n_blocks >= 2 and n_blocks % 2 == 0) else 1
    inner = n_blocks // g_split

    # ---- one-time layout prep (XLA data movement): pool-position-major im2col -----
    # lhs_all row (b, g, r) holds the 9*Cin taps of the conv output pixel at full-res
    # position (2*oh + ph, 2*ow + pw), with g = 2*ph + pw, r = oh*W/2 + ow.
    x = jnp.transpose(x_nchw, (0, 2, 3, 1))                  # NHWC
    xp = jnp.pad(x, ((0, 0), (1, 1), (1, 1), (0, 0)))        # (N, H+2, W+2, Cin)
    taps = [xp[:, kh:kh + h, kw:kw + w, :] for kh in range(3) for kw in range(3)]
    col = jnp.concatenate(taps, axis=-1)                     # (N, H, W, 9*Cin)
    col = col.reshape(n, h2, 2, w2, 2, k)
    col = jnp.transpose(col, (0, 2, 4, 1, 3, 5))             # (N, ph, pw, oh, ow, K)
    col = col.reshape(n, 4, m2, k)
    col = jnp.pad(col, ((0, n_pad - n), (0, 0), (0, m2p - m2), (0, 0)))
    lhs_all = col.reshape(n_pad * 4 * m2p, k).astype(compute_dtype)

    # Folded RHS: row index = (kh*3 + kw)*Cin + ci  (matches the tap concat above).
    w_rhs = jnp.transpose(conv_w_oihw, (2, 3, 1, 0)).reshape(k, cout)
    w_rhs = jnp.pad(w_rhs, ((0, 0), (0, cpad - cout))).astype(compute_dtype)

    lhs_block = (nb * 4 * m2p, k)
    flops = 2 * n_pad * 4 * m2p * k * cpad                   # per pass
    lhs_bytes = n_pad * 4 * m2p * k * 2
    w_bytes = k * cpad * 2

    # ---- pass 1: batch statistics (inner axis = reduction over batch blocks) ------
    stats = pl.pallas_call(
        _stats_kernel,
        grid=(g_split, inner),
        in_specs=[pl.BlockSpec(lhs_block, lambda g, i: (g * inner + i, 0)),
                  pl.BlockSpec((k, cpad), lambda g, i: (0, 0))],     # VMEM-resident
        out_specs=(pl.BlockSpec((1, 8, cpad), lambda g, i: (g, 0, 0)),) * 2,
        out_shape=(jax.ShapeDtypeStruct((g_split, 8, cpad), jnp.float32),) * 2,
        compiler_params=pltpu.CompilerParams(
            dimension_semantics=("parallel", "arbitrary"),
            vmem_limit_bytes=_VMEM_LIMIT),
        cost_estimate=pl.CostEstimate(
            flops=flops, transcendentals=0,
            bytes_accessed=lhs_bytes + w_bytes + 2 * g_split * 8 * cpad * 4),
    )(lhs_all, w_rhs)
    sum_y = stats[0].sum(axis=(0, 1))
    sum_yy = stats[1].sum(axis=(0, 1))

    # Fold BatchNorm (training-mode batch stats, biased variance) into scale/shift (f32).
    # NOTE: E[y^2] - E[y]^2; for very large N*H*W or strongly offset activations use
    # shifted / Welford accumulation (precision concern, the max() guard avoids NaN).
    cnt = jnp.float32(n * h * w)
    mean = sum_y / cnt
    var = jnp.maximum(sum_yy / cnt - mean * mean, 0.0)
    inv = jax.lax.rsqrt(var + BN_EPS)
    gamma_p = jnp.pad(gamma.astype(jnp.float32), (0, cpad - cout))
    beta_p = jnp.pad(beta.astype(jnp.float32), (0, cpad - cout))
    scale = (gamma_p * inv).reshape(1, cpad)
    shift = (beta_p - mean * gamma_p * inv).reshape(1, cpad)

    # ---- pass 2: conv -> BN -> ReLU -> 2x2 max-pool (megacore-parallel over blocks) -
    out = pl.pallas_call(
        _finish_kernel,
        grid=(n_blocks,),
        in_specs=[pl.BlockSpec(lhs_block, lambda i: (i, 0)),
                  pl.BlockSpec((k, cpad), lambda i: (0, 0)),
                  pl.BlockSpec((1, cpad), lambda i: (0, 0)),
                  pl.BlockSpec((1, cpad), lambda i: (0, 0))],
        out_specs=pl.BlockSpec((nb, m2p, cpad), lambda i: (i, 0, 0)),
        out_shape=jax.ShapeDtypeStruct((n_pad, m2p, cpad), jnp.bfloat16),
        compiler_params=pltpu.CompilerParams(
            dimension_semantics=("parallel",),
            vmem_limit_bytes=_VMEM_LIMIT),
        cost_estimate=pl.CostEstimate(
            flops=flops, transcendentals=0,
            bytes_accessed=lhs_bytes + w_bytes + 2 * cpad * 4 + n_pad * m2p * cpad * 2),
    )(lhs_all, w_rhs, scale, shift)

    out = out[:n, :m2, :cout].astype(jnp.float32).reshape(n, h2, w2, cout)
    # NOTE: if the consumer accepts NHWC / bf16, return before the cast/transpose.
    return jnp.transpose(out, (0, 3, 1, 2))


def block_reference(x_nchw, conv_w_oihw, gamma, beta):
    """Pure-JAX reference of the PyTorch module (training-mode BN)."""
    y = jax.lax.conv_general_dilated(
        x_nchw, conv_w_oihw, window_strides=(1, 1), padding="SAME",
        dimension_numbers=("NCHW", "OIHW", "NCHW"))
    mean = y.mean(axis=(0, 2, 3), keepdims=True)
    var = ((y - mean) ** 2).mean(axis=(0, 2, 3), keepdims=True)
    y = (y - mean) / jnp.sqrt(var + BN_EPS)
    y = y * gamma.reshape(1, -1, 1, 1) + beta.reshape(1, -1, 1, 1)
    y = jnp.maximum(y, 0.0)
    y = jax.lax.reduce_window(y, -jnp.inf, jax.lax.max,
                              (1, 1, 2, 2), (1, 1, 2, 2), "VALID")
    return y


if __name__ == "__main__":
    # Small shapes consistent with the module: N=2, n_in=4, n_out=8, H=W=16.
    N, C_IN, C_OUT, H, W = 2, 4, 8, 16, 16

    key = jax.random.PRNGKey(0)
    kx, kwt, kg, kb = jax.random.split(key, 4)

    x = jax.random.normal(kx, (N, C_IN, H, W), dtype=jnp.float32)
    conv_w = jax.random.normal(kwt, (C_OUT, C_IN, 3, 3), dtype=jnp.float32) * 0.1
    gamma = 1.0 + 0.1 * jax.random.normal(kg, (C_OUT,), dtype=jnp.float32)
    beta = 0.1 * jax.random.normal(kb, (C_OUT,), dtype=jnp.float32)

    out = jax.block_until_ready(jax.jit(block_forward)(x, conv_w, gamma, beta))

    # Tight check: reference fed the exact bf16-rounded inputs the kernel's MXU
    # consumes (remaining error = bf16 rounding of the kernel's output store).
    x_b = x.astype(jnp.bfloat16).astype(jnp.float32)
    w_b = conv_w.astype(jnp.bfloat16).astype(jnp.float32)
    ref_b = jax.block_until_ready(block_reference(x_b, w_b, gamma, beta))
    # Loose check: pure f32 reference (difference = bf16 rounding of inputs/output only).
    ref_f = jax.block_until_ready(block_reference(x, conv_w, gamma, beta))

    assert out.shape == (N, C_OUT, H // 2, W // 2), out.shape
    err_b = float(jnp.max(jnp.abs(out - ref_b)))
    err_f = float(jnp.max(jnp.abs(out - ref_f)))
    assert jnp.allclose(out, ref_b, atol=5e-2, rtol=5e-2), err_b
    assert jnp.allclose(out, ref_f, atol=2e-1, rtol=2e-1), err_f

    print("KERNEL_OK")
</pallas_src>

<mosaic_0001>
module attributes {stable_mosaic.version = 11 : i64} {
  func.func @_stats_kernel(%arg0: i32, %arg1: i32, %arg2: memref<512x36xbf16, #tpu.memory_space<vmem>>, %arg3: memref<36x128xbf16, #tpu.memory_space<vmem>>, %arg4: memref<1x8x128xf32, #tpu.memory_space<vmem>>, %arg5: memref<1x8x128xf32, #tpu.memory_space<vmem>>) attributes {dimension_semantics = [#tpu.dimension_semantics<parallel>, #tpu.dimension_semantics<arbitrary>], iteration_bounds = array<i64: 1, 1>, scalar_prefetch = 0 : i64, scratch_operands = 0 : i64, tpu.core_type = #tpu.core_type<tc>, window_params = [{transform_indices = @transform_0, window_bounds = array<i64: 512, 36>}, {pipeline_mode = #tpu.pipeline_mode<synchronous>, transform_indices = @transform_1, window_bounds = array<i64: 36, 128>}, {transform_indices = @transform_2, window_bounds = array<i64: 1, 8, 128>}, {transform_indices = @transform_3, window_bounds = array<i64: 1, 8, 128>}]} {
    %c0_i32 = arith.constant 0 : i32
    %0 = arith.cmpi eq, %arg1, %c0_i32 : i32
    %1 = arith.extui %0 : i1 to i32
    %c0_i32_0 = arith.constant 0 : i32
    %2 = arith.cmpi ne, %1, %c0_i32_0 : i32
    scf.if %2 {
      %cst_18 = arith.constant 0.000000e+00 : f32
      %18 = vector.broadcast %cst_18 : f32 to vector<1x8x128xf32>
      %c0_19 = arith.constant 0 : index
      %c0_20 = arith.constant 0 : index
      %c0_21 = arith.constant 0 : index
      %19 = vector.load %arg4[%c0_19, %c0_20, %c0_21] : memref<1x8x128xf32, #tpu.memory_space<vmem>>, vector<1x8x128xf32>
      tpu.vector_store %arg4[%c0_19, %c0_20, %c0_21], %18 {strides = array<i32>} : memref<1x8x128xf32, #tpu.memory_space<vmem>>, vector<1x8x128xf32>,
      %cst_22 = arith.constant 0.000000e+00 : f32
      %20 = vector.broadcast %cst_22 : f32 to vector<1x8x128xf32>
      %c0_23 = arith.constant 0 : index
      %c0_24 = arith.constant 0 : index
      %c0_25 = arith.constant 0 : index
      %21 = vector.load %arg5[%c0_23, %c0_24, %c0_25] : memref<1x8x128xf32, #tpu.memory_space<vmem>>, vector<1x8x128xf32>
      tpu.vector_store %arg5[%c0_23, %c0_24, %c0_25], %20 {strides = array<i32>} : memref<1x8x128xf32, #tpu.memory_space<vmem>>, vector<1x8x128xf32>,
    } else {
    }
    %c0 = arith.constant 0 : index
    %c0_1 = arith.constant 0 : index
    %3 = vector.load %arg2[%c0, %c0_1] : memref<512x36xbf16, #tpu.memory_space<vmem>>, vector<512x36xbf16>
    %c0_2 = arith.constant 0 : index
    %c0_3 = arith.constant 0 : index
    %4 = vector.load %arg3[%c0_2, %c0_3] : memref<36x128xbf16, #tpu.memory_space<vmem>>, vector<36x128xbf16>
    %cst = arith.constant dense<0.000000e+00> : vector<512x128xf32>
    %5 = tpu.matmul %3, %4, %cst {dimension_numbers = #tpu.dot_dimension_numbers<[1], [0], [0], [1], [0, 0, 1, 1], [], []>} : vector<512x36xbf16>, vector<36x128xbf16>, vector<512x128xf32> -> vector<512x128xf32>
    %6 = vector.shape_cast %5 : vector<512x128xf32> to vector<64x8x128xf32>
    %c0_4 = arith.constant 0 : index
    %c0_5 = arith.constant 0 : index
    %c0_6 = arith.constant 0 : index
    %7 = vector.load %arg4[%c0_4, %c0_5, %c0_6] : memref<1x8x128xf32, #tpu.memory_space<vmem>>, vector<1x8x128xf32>
    %cst_7 = arith.constant dense<0.000000e+00> : vector<8x128xf32>
    %8 = vector.multi_reduction <add>, %6, %cst_7 [0] : vector<64x8x128xf32> to vector<8x128xf32>
    %9 = vector.shape_cast %8 : vector<8x128xf32> to vector<1x8x128xf32>
    %10 = arith.addf %7, %9 : vector<1x8x128xf32>
    %c0_8 = arith.constant 0 : index
    %c0_9 = arith.constant 0 : index
    %c0_10 = arith.constant 0 : index
    %11 = vector.load %arg4[%c0_8, %c0_9, %c0_10] : memref<1x8x128xf32, #tpu.memory_space<vmem>>, vector<1x8x128xf32>
    tpu.vector_store %arg4[%c0_8, %c0_9, %c0_10], %10 {strides = array<i32>} : memref<1x8x128xf32, #tpu.memory_space<vmem>>, vector<1x8x128xf32>,
    %c0_11 = arith.constant 0 : index
    %c0_12 = arith.constant 0 : index
    %c0_13 = arith.constant 0 : index
    %12 = vector.load %arg5[%c0_11, %c0_12, %c0_13] : memref<1x8x128xf32, #tpu.memory_space<vmem>>, vector<1x8x128xf32>
    %13 = arith.mulf %6, %6 : vector<64x8x128xf32>
    %cst_14 = arith.constant dense<0.000000e+00> : vector<8x128xf32>
    %14 = vector.multi_reduction <add>, %13, %cst_14 [0] : vector<64x8x128xf32> to vector<8x128xf32>
    %15 = vector.shape_cast %14 : vector<8x128xf32> to vector<1x8x128xf32>
    %16 = arith.addf %12, %15 : vector<1x8x128xf32>
    %c0_15 = arith.constant 0 : index
    %c0_16 = arith.constant 0 : index
    %c0_17 = arith.constant 0 : index
    %17 = vector.load %arg5[%c0_15, %c0_16, %c0_17] : memref<1x8x128xf32, #tpu.memory_space<vmem>>, vector<1x8x128xf32>
    tpu.vector_store %arg5[%c0_15, %c0_16, %c0_17], %16 {strides = array<i32>} : memref<1x8x128xf32, #tpu.memory_space<vmem>>, vector<1x8x128xf32>,
    return
  }
  func.func @transform_0(%arg0: i32, %arg1: i32) -> (i32, i32) {
    %c1_i32 = arith.constant 1 : i32
    %0 = arith.muli %arg0, %c1_i32 : i32
    %1 = arith.addi %0, %arg1 : i32
    %c0_i32 = arith.constant 0 : i32
    %c0_i32_0 = arith.constant 0 : i32
    return %1, %c0_i32 : i32, i32
  }
  func.func @transform_1(%arg0: i32, %arg1: i32) -> (i32, i32) {
    %c0_i32 = arith.constant 0 : i32
    %c0_i32_0 = arith.constant 0 : i32
    %c0_i32_1 = arith.constant 0 : i32
    return %c0_i32, %c0_i32_0 : i32, i32
  }
  func.func @transform_2(%arg0: i32, %arg1: i32) -> (i32, i32, i32) {
    %c0_i32 = arith.constant 0 : i32
    %c0_i32_0 = arith.constant 0 : i32
    %c0_i32_1 = arith.constant 0 : i32
    return %arg0, %c0_i32, %c0_i32_0 : i32, i32, i32
  }
  func.func @transform_3(%arg0: i32, %arg1: i32) -> (i32, i32, i32) {
    %c0_i32 = arith.constant 0 : i32
    %c0_i32_0 = arith.constant 0 : i32
    %c0_i32_1 = arith.constant 0 : i32
    return %arg0, %c0_i32, %c0_i32_0 : i32, i32, i32
  }
}

module attributes {stable_mosaic.version = 11 : i64} {
  func.func @_finish_kernel(%arg0: i32, %arg1: memref<512x36xbf16, #tpu.memory_space<vmem>>, %arg2: memref<36x128xbf16, #tpu.memory_space<vmem>>, %arg3: memref<1x128xf32, #tpu.memory_space<vmem>>, %arg4: memref<1x128xf32, #tpu.memory_space<vmem>>, %arg5: memref<2x64x128xbf16, #tpu.memory_space<vmem>>) attributes {dimension_semantics = [#tpu.dimension_semantics<parallel>], iteration_bounds = array<i64: 1>, scalar_prefetch = 0 : i64, scratch_operands = 0 : i64, tpu.core_type = #tpu.core_type<tc>, window_params = [{transform_indices = @transform_0, window_bounds = array<i64: 512, 36>}, {pipeline_mode = #tpu.pipeline_mode<synchronous>, transform_indices = @transform_1, window_bounds = array<i64: 36, 128>}, {pipeline_mode = #tpu.pipeline_mode<synchronous>, transform_indices = @transform_2, window_bounds = array<i64: 1, 128>}, {pipeline_mode = #tpu.pipeline_mode<synchronous>, transform_indices = @transform_3, window_bounds = array<i64: 1, 128>}, {transform_indices = @transform_4, window_bounds = array<i64: 2, 64, 128>}]} {
    %c0 = arith.constant 0 : index
    %c0_0 = arith.constant 0 : index
    %0 = vector.load %arg1[%c0, %c0_0] : memref<512x36xbf16, #tpu.memory_space<vmem>>, vector<512x36xbf16>
    %c0_1 = arith.constant 0 : index
    %c0_2 = arith.constant 0 : index
    %1 = vector.load %arg2[%c0_1, %c0_2] : memref<36x128xbf16, #tpu.memory_space<vmem>>, vector<36x128xbf16>
    %cst = arith.constant dense<0.000000e+00> : vector<512x128xf32>
    %2 = tpu.matmul %0, %1, %cst {dimension_numbers = #tpu.dot_dimension_numbers<[1], [0], [0], [1], [0, 0, 1, 1], [], []>} : vector<512x36xbf16>, vector<36x128xbf16>, vector<512x128xf32> -> vector<512x128xf32>
    %c0_3 = arith.constant 0 : index
    %c0_4 = arith.constant 0 : index
    %3 = vector.load %arg3[%c0_3, %c0_4] : memref<1x128xf32, #tpu.memory_space<vmem>>, vector<1x128xf32>
    %4 = vector.broadcast %3 : vector<1x128xf32> to vector<512x128xf32>
    %5 = arith.mulf %2, %4 : vector<512x128xf32>
    %c0_5 = arith.constant 0 : index
    %c0_6 = arith.constant 0 : index
    %6 = vector.load %arg4[%c0_5, %c0_6] : memref<1x128xf32, #tpu.memory_space<vmem>>, vector<1x128xf32>
    %7 = vector.broadcast %6 : vector<1x128xf32> to vector<512x128xf32>
    %8 = arith.addf %5, %7 : vector<512x128xf32>
    %cst_7 = arith.constant 0.000000e+00 : f32
    %9 = vector.broadcast %cst_7 : f32 to vector<512x128xf32>
    %10 = arith.maximumf %8, %9 : vector<512x128xf32>
    %11 = vector.shape_cast %10 : vector<512x128xf32> to vector<2x4x64x128xf32>
    %cst_8 = arith.constant dense<0xFF800000> : vector<2x64x128xf32>
    %12 = vector.multi_reduction <maximumf>, %11, %cst_8 [1] : vector<2x4x64x128xf32> to vector<2x64x128xf32>
    %13 = arith.truncf %12 : vector<2x64x128xf32> to vector<2x64x128xbf16>
    %c0_9 = arith.constant 0 : index
    %c0_10 = arith.constant 0 : index
    %c0_11 = arith.constant 0 : index
    %14 = vector.load %arg5[%c0_9, %c0_10, %c0_11] : memref<2x64x128xbf16, #tpu.memory_space<vmem>>, vector<2x64x128xbf16>
    tpu.vector_store %arg5[%c0_9, %c0_10, %c0_11], %13 {strides = array<i32>} : memref<2x64x128xbf16, #tpu.memory_space<vmem>>, vector<2x64x128xbf16>,
    return
  }
  func.func @transform_0(%arg0: i32) -> (i32, i32) {
    %c0_i32 = arith.constant 0 : i32
    %c0_i32_0 = arith.constant 0 : i32
    return %arg0, %c0_i32 : i32, i32
  }
  func.func @transform_1(%arg0: i32) -> (i32, i32) {
    %c0_i32 = arith.constant 0 : i32
    %c0_i32_0 = arith.constant 0 : i32
    %c0_i32_1 = arith.constant 0 : i32
    return %c0_i32, %c0_i32_0 : i32, i32
  }
  func.func @transform_2(%arg0: i32) -> (i32, i32) {
    %c0_i32 = arith.constant 0 : i32
    %c0_i32_0 = arith.constant 0 : i32
    %c0_i32_1 = arith.constant 0 : i32
    return %c0_i32, %c0_i32_0 : i32, i32
  }
  func.func @transform_3(%arg0: i32) -> (i32, i32) {
    %c0_i32 = arith.constant 0 : i32
    %c0_i32_0 = arith.constant 0 : i32
    %c0_i32_1 = arith.constant 0 : i32
    return %c0_i32, %c0_i32_0 : i32, i32
  }
  func.func @transform_4(%arg0: i32) -> (i32, i32, i32) {
    %c0_i32 = arith.constant 0 : i32
    %c0_i32_0 = arith.constant 0 : i32
    %c0_i32_1 = arith.constant 0 : i32
    return %arg0, %c0_i32, %c0_i32_0 : i32, i32, i32
  }
}

</mosaic_0001>

<llo_original>
// kernel: block_forward.2
$region0: #{block_forward.2}
  #allocation0 [shape = 'u32[]', space=smem, size = 0x4, offset = 0x4, fixed_abs, tag = 'smem constant byte address 0x4 - core index']
  #allocation1 [shape = 'u32[72,128]{1,0:T(1,128)}', space=vmem, size = 0x9000, scoped, tag = 'internal scratch']
  %s0 = inlined_call_operand.vmem [shape: bf16[512,36], index: 0, kind: input, shape index: {}]
  %s1 = inlined_call_operand.vmem [shape: bf16[36,128], index: 1, kind: input, shape index: {}]
  %s2 = inlined_call_operand.vmem [shape: f32[1,8,128], index: 2, kind: output, shape index: {0}]
  %s3 = inlined_call_operand.vmem [shape: f32[1,8,128], index: 3, kind: output, shape index: {1}]
  %4 = xla_tuple %s2, %s3
  %s5 = sld [smem:[#allocation0]]
  $region30: #{block_forward.2} parent=0
    _
  %s7 = ssub.s32 1, %s5
  %s8 = scalar_select 0, %s7, %s5
  // Predicated region
  $region2: #{block_forward.2} parent=0 // pred_check
    _
  $region3: #{block_forward.2} parent=0 // pred_check_branch
    %10 = sbr.rel (0) target = $region5
  $region4: #{block_forward.2} parent=0 // pred_region
    %s11 = sadd.s32 0, 0
    %s12 = smul.u32 64, %s11
    %p13 = scmp.lt.s32.totalorder %s12, 63
    %s14 = scalar_select %p13, %s12, 63
    %s15 = smul.addr %s14, 4
    %s16 = scalar_lea.vmem %s0, %s15
    %s17 = sadd.s32 0, 0
    %s18 = smul.u32 64, %s17
  $region5: #{block_forward.2} parent=0 // pred_fallthru
    _
  // Predicated region
  $region6: #{block_forward.2} parent=0 // pred_check
    _
  $region7: #{block_forward.2} parent=0 // pred_check_branch
    %20 = sbr.rel (0) target = $region9
  $region8: #{block_forward.2} parent=0 // pred_region
    _
  $region9: #{block_forward.2} parent=0 // pred_fallthru
    _
  %s21 = sadd.s32 0, 0
  %s22 = smul.u32 64, %s21
  %p23 = scmp.lt.s32.totalorder %s22, 63
  %s24 = scalar_select %p23, %s22, 63
  %s25 = smul.addr %s24, 4
  %s26 = scalar_lea.vmem %s0, %s25
  %s27 = sadd.s32 0, 0
  %s28 = smul.u32 64, %s27
  %p29 = scmp.lt.s32.totalorder %s28, 63
  %s30 = scalar_select %p29, %s28, 63
  %s31 = smul.addr %s30, 4
  %s32 = scalar_lea.vmem %s0, %s31
  %s33 = sadd.s32 0, 0
  %s34 = smul.u32 64, %s33
  %p36 = scmp.eq.s32.totalorder 0, 0
  // Predicated region
  $region10: #{block_forward.2} parent=0 // pred_check
    %p37 = pneg %p36
  $region11: #{block_forward.2} parent=0 // pred_check_branch
    %39 = sbr.rel (%p37) target = $region13
  $region12: #{block_forward.2} parent=0 // pred_region
    %40 = vst [vmem:[%s2] sm:$0xff] 0.0
    %41 = vst [vmem:[%s3] sm:$0xff] 0.0
  $region13: #{block_forward.2} parent=0 // pred_fallthru
    _
  %v42 = vld [vmem:[%s32] sm:$0xf]
  %v43 = vld [vmem:[%s32 + $0x4] sm:$0xf]
  %v44 = vld [vmem:[%s32 + $0x8] sm:$0xf]
  %v45 = vld [vmem:[%s32 + $0xc] sm:$0xf]
  %v46 = vld [vmem:[%s32 + $0x10] sm:$0xf]
  %v47 = vld [vmem:[%s32 + $0x14] sm:$0xf]
  %v48 = vld [vmem:[%s32 + $0x18] sm:$0xf]
  %v49 = vld [vmem:[%s32 + $0x1c] sm:$0xf]
  %v50 = vld [vmem:[%s32 + $0x20] sm:$0xf]
  %v51 = vld [vmem:[%s32 + $0x24] sm:$0xf]
  %v52 = vld [vmem:[%s32 + $0x28] sm:$0xf]
  %v53 = vld [vmem:[%s32 + $0x2c] sm:$0xf]
  %v54 = vld [vmem:[%s32 + $0x30] sm:$0xf]
  %v55 = vld [vmem:[%s32 + $0x34] sm:$0xf]
  %v56 = vld [vmem:[%s32 + $0x38] sm:$0xf]
  %v57 = vld [vmem:[%s32 + $0x3c] sm:$0xf]
  %v58 = vld [vmem:[%s32 + $0x40] sm:$0xf]
  %v59 = vld [vmem:[%s32 + $0x44] sm:$0xf]
  %v60 = vld [vmem:[%s32 + $0x48] sm:$0xf]
  %v61 = vld [vmem:[%s32 + $0x4c] sm:$0xf]
  %v62 = vld [vmem:[%s32 + $0x50] sm:$0xf]
  %v63 = vld [vmem:[%s32 + $0x54] sm:$0xf]
  %v64 = vld [vmem:[%s32 + $0x58] sm:$0xf]
  %v65 = vld [vmem:[%s32 + $0x5c] sm:$0xf]
  %v66 = vld [vmem:[%s32 + $0x60] sm:$0xf]
  %v67 = vld [vmem:[%s32 + $0x64] sm:$0xf]
  %v68 = vld [vmem:[%s32 + $0x68] sm:$0xf]
  %v69 = vld [vmem:[%s32 + $0x6c] sm:$0xf]
  %v70 = vld [vmem:[%s32 + $0x70] sm:$0xf]
  %v71 = vld [vmem:[%s32 + $0x74] sm:$0xf]
  %v72 = vld [vmem:[%s32 + $0x78] sm:$0xf]
  %v73 = vld [vmem:[%s32 + $0x7c] sm:$0xf]
  %v74 = vld [vmem:[%s32 + $0x80] sm:$0xf]
  %v75 = vld [vmem:[%s32 + $0x84] sm:$0xf]
  %v76 = vld [vmem:[%s32 + $0x88] sm:$0xf]
  %v77 = vld [vmem:[%s32 + $0x8c] sm:$0xf]
  %v78 = vld [vmem:[%s32 + $0x90] sm:$0xf]
  %v79 = vld [vmem:[%s32 + $0x94] sm:$0xf]
  %v80 = vld [vmem:[%s32 + $0x98] sm:$0xf]
  %v81 = vld [vmem:[%s32 + $0x9c] sm:$0xf]
  %v82 = vld [vmem:[%s32 + $0xa0] sm:$0xf]
  %v83 = vld [vmem:[%s32 + $0xa4] sm:$0xf]
  %v84 = vld [vmem:[%s32 + $0xa8] sm:$0xf]
  %v85 = vld [vmem:[%s32 + $0xac] sm:$0xf]
  %v86 = vld [vmem:[%s32 + $0xb0] sm:$0xf]
  %v87 = vld [vmem:[%s32 + $0xb4] sm:$0xf]
  %v88 = vld [vmem:[%s32 + $0xb8] sm:$0xf]
  %v89 = vld [vmem:[%s32 + $0xbc] sm:$0xf]
  %v90 = vld [vmem:[%s32 + $0xc0] sm:$0xf]
  %v91 = vld [vmem:[%s32 + $0xc4] sm:$0xf]
  %v92 = vld [vmem:[%s32 + $0xc8] sm:$0xf]
  %v93 = vld [vmem:[%s32 + $0xcc] sm:$0xf]
  %v94 = vld [vmem:[%s32 + $0xd0] sm:$0xf]
  %v95 = vld [vmem:[%s32 + $0xd4] sm:$0xf]
  %v96 = vld [vmem:[%s32 + $0xd8] sm:$0xf]
  %v97 = vld [vmem:[%s32 + $0xdc] sm:$0xf]
  %v98 = vld [vmem:[%s32 + $0xe0] sm:$0xf]
  %v99 = vld [vmem:[%s32 + $0xe4] sm:$0xf]
  %v100 = vld [vmem:[%s32 + $0xe8] sm:$0xf]
  %v101 = vld [vmem:[%s32 + $0xec] sm:$0xf]
  %v102 = vld [vmem:[%s32 + $0xf0] sm:$0xf]
  %v103 = vld [vmem:[%s32 + $0xf4] sm:$0xf]
  %v104 = vld [vmem:[%s32 + $0xf8] sm:$0xf]
  %v105 = vld [vmem:[%s32 + $0xfc] sm:$0xf]
  %v106 = vld [vmem:[%s1] sm:$0xf]
  %v107 = vld [vmem:[%s1 + $0x4] sm:$0xf]
  %v108 = vld [vmem:[%s1 + $0x8] sm:$0xf]
  %v109 = vld [vmem:[%s1 + $0xc] sm:$0xf]
  %v110 = vld [vmem:[%s1 + $0x10] sm:$0x3]
  %v175 = vunpack.c.l.b16 %v42
  %v176 = vunpack.c.l.b16 %v43
  %v177 = vunpack.c.l.b16 %v44
  %v178 = vunpack.c.l.b16 %v45
  %v179 = vunpack.c.l.b16 %v46
  %v180 = vunpack.c.l.b16 %v47
  %v181 = vunpack.c.l.b16 %v48
  %v182 = vunpack.c.l.b16 %v49
  %v183 = vunpack.c.l.b16 %v50
  %v184 = vunpack.c.l.b16 %v51
  %v185 = vunpack.c.l.b16 %v52
  %v186 = vunpack.c.l.b16 %v53
  %v187 = vunpack.c.l.b16 %v54
  %v188 = vunpack.c.l.b16 %v55
  %v189 = vunpack.c.l.b16 %v56
  %v190 = vunpack.c.l.b16 %v57
  %v191 = vunpack.c.l.b16 %v58
  %v192 = vunpack.c.l.b16 %v59
  %v193 = vunpack.c.l.b16 %v60
  %v194 = vunpack.c.l.b16 %v61
  %v195 = vunpack.c.l.b16 %v62
  %v196 = vunpack.c.l.b16 %v63
  %v197 = vunpack.c.l.b16 %v64
  %v198 = vunpack.c.l.b16 %v65
  %v199 = vunpack.c.l.b16 %v66
  %v200 = vunpack.c.l.b16 %v67
  %v201 = vunpack.c.l.b16 %v68
  %v202 = vunpack.c.l.b16 %v69
  %v203 = vunpack.c.l.b16 %v70
  %v204 = vunpack.c.l.b16 %v71
  %v205 = vunpack.c.l.b16 %v72
  %v206 = vunpack.c.l.b16 %v73
  %v207 = vunpack.c.l.b16 %v74
  %v208 = vunpack.c.l.b16 %v75
  %v209 = vunpack.c.l.b16 %v76
  %v210 = vunpack.c.l.b16 %v77
  %v211 = vunpack.c.l.b16 %v78
  %v212 = vunpack.c.l.b16 %v79
  %v213 = vunpack.c.l.b16 %v80
  %v214 = vunpack.c.l.b16 %v81
  %v215 = vunpack.c.l.b16 %v82
  %v216 = vunpack.c.l.b16 %v83
  %v217 = vunpack.c.l.b16 %v84
  %v218 = vunpack.c.l.b16 %v85
  %v219 = vunpack.c.l.b16 %v86
  %v220 = vunpack.c.l.b16 %v87
  %v221 = vunpack.c.l.b16 %v88
  %v222 = vunpack.c.l.b16 %v89
  %v223 = vunpack.c.l.b16 %v90
  %v224 = vunpack.c.l.b16 %v91
  %v225 = vunpack.c.l.b16 %v92
  %v226 = vunpack.c.l.b16 %v93
  %v227 = vunpack.c.l.b16 %v94
  %v228 = vunpack.c.l.b16 %v95
  %v229 = vunpack.c.l.b16 %v96
  %v230 = vunpack.c.l.b16 %v97
  %v231 = vunpack.c.l.b16 %v98
  %v232 = vunpack.c.l.b16 %v99
  %v233 = vunpack.c.l.b16 %v100
  %v234 = vunpack.c.l.b16 %v101
  %v235 = vunpack.c.l.b16 %v102
  %v236 = vunpack.c.l.b16 %v103
  %v237 = vunpack.c.l.b16 %v104
  %v238 = vunpack.c.l.b16 %v105
  %v239 = vpack.c.b16 %v176, %v175
  %v240 = vpack.c.b16 %v178, %v177
  %v241 = vpack.c.b16 %v180, %v179
  %v242 = vpack.c.b16 %v182, %v181
  %v243 = vpack.c.b16 %v184, %v183
  %v244 = vpack.c.b16 %v186, %v185
  %v245 = vpack.c.b16 %v188, %v187
  %v246 = vpack.c.b16 %v190, %v189
  %v247 = vpack.c.b16 %v192, %v191
  %v248 = vpack.c.b16 %v194, %v193
  %v249 = vpack.c.b16 %v196, %v195
  %v250 = vpack.c.b16 %v198, %v197
  %v251 = vpack.c.b16 %v200, %v199
  %v252 = vpack.c.b16 %v202, %v201
  %v253 = vpack.c.b16 %v204, %v203
  %v254 = vpack.c.b16 %v206, %v205
  %v255 = vpack.c.b16 %v208, %v207
  %v256 = vpack.c.b16 %v210, %v209
  %v257 = vpack.c.b16 %v212, %v211
  %v258 = vpack.c.b16 %v214, %v213
  %v259 = vpack.c.b16 %v216, %v215
  %v260 = vpack.c.b16 %v218, %v217
  %v261 = vpack.c.b16 %v220, %v219
  %v262 = vpack.c.b16 %v222, %v221
  %v263 = vpack.c.b16 %v224, %v223
  %v264 = vpack.c.b16 %v226, %v225
  %v265 = vpack.c.b16 %v228, %v227
  %v266 = vpack.c.b16 %v230, %v229
  %v267 = vpack.c.b16 %v232, %v231
  %v268 = vpack.c.b16 %v234, %v233
  %v269 = vpack.c.b16 %v236, %v235
  %v270 = vpack.c.b16 %v238, %v237
  %v276 = vunpack.c.l.b16 %v106
  %v277 = vunpack.c.l.b16 %v107
  %v278 = vunpack.c.l.b16 %v108
  %v279 = vunpack.c.l.b16 %v109
  %v280 = vunpack.c.l.b16 %v110
  %v281 = vpack.c.b16 %v277, %v276
  %v282 = vpack.c.b16 %v279, %v278
  %v283 = vpack.c.b16 %v280, %v280
  %vm286 = vcmask 293888
  %v288 = vsel %vm286, %v239, 0
  %v291 = vsel %vm286, %v240, 0
  %v294 = vsel %vm286, %v241, 0
  %v297 = vsel %vm286, %v242, 0
  %v300 = vsel %vm286, %v243, 0
  %v303 = vsel %vm286, %v244, 0
  %v306 = vsel %vm286, %v245, 0
  %v309 = vsel %vm286, %v246, 0
  %v312 = vsel %vm286, %v247, 0
  %v315 = vsel %vm286, %v248, 0
  %v318 = vsel %vm286, %v249, 0
  %v321 = vsel %vm286, %v250, 0
  %v324 = vsel %vm286, %v251, 0
  %v327 = vsel %vm286, %v252, 0
  %v330 = vsel %vm286, %v253, 0
  %v333 = vsel %vm286, %v254, 0
  %v336 = vsel %vm286, %v255, 0
  %v339 = vsel %vm286, %v256, 0
  %v342 = vsel %vm286, %v257, 0
  %v345 = vsel %vm286, %v258, 0
  %v348 = vsel %vm286, %v259, 0
  %v351 = vsel %vm286, %v260, 0
  %v354 = vsel %vm286, %v261, 0
  %v357 = vsel %vm286, %v262, 0
  %v360 = vsel %vm286, %v263, 0
  %v363 = vsel %vm286, %v264, 0
  %v366 = vsel %vm286, %v265, 0
  %v369 = vsel %vm286, %v266, 0
  %v372 = vsel %vm286, %v267, 0
  %v375 = vsel %vm286, %v268, 0
  %v378 = vsel %vm286, %v269, 0
  %v381 = vsel %vm286, %v270, 0
  %vm383 = vcmask 1041408
  %v385 = vsel %vm383, %v283, 0
  %387 = vmatpush.bf16.msra.mxu0 0
  %388 = vmatpush.bf16.msra.mxu0 0
  %389 = vmatpush.bf16.msra.mxu0 0
  %390 = vmatpush.bf16.msra.mxu0 0
  %391 = vmatpush.bf16.msra.mxu0 0
  %392 = vmatpush.bf16.msra.mxu0 %v385
  %393 = vmatpush.bf16.msra.mxu0 %v282
  %394 = vmatpush.bf16.msra.mxu0 %v281
  %395 = vmatmul.bf16.gmra.mxu0 %v288
  %v396 = vpop.f32.mrf.mxu0
  %v397 = vadd.f32 0.0, %v396
  %v398 = vpop.f32.mrf.mxu0
  %v399 = vadd.f32 0.0, %v398
  %400 = vmatmul.bf16.gmra.mxu0 %v291
  %v401 = vpop.f32.mrf.mxu0
  %v402 = vadd.f32 0.0, %v401
  %v403 = vpop.f32.mrf.mxu0
  %v404 = vadd.f32 0.0, %v403
  %405 = vmatmul.bf16.gmra.mxu0 %v294
  %v406 = vpop.f32.mrf.mxu0
  %v407 = vadd.f32 0.0, %v406
  %v408 = vpop.f32.mrf.mxu0
  %v409 = vadd.f32 0.0, %v408
  %410 = vmatmul.bf16.gmra.mxu0 %v297
  %v411 = vpop.f32.mrf.mxu0
  %v412 = vadd.f32 0.0, %v411
  %v413 = vpop.f32.mrf.mxu0
  %v414 = vadd.f32 0.0, %v413
  %415 = vmatmul.bf16.gmra.mxu0 %v300
  %v416 = vpop.f32.mrf.mxu0
  %v417 = vadd.f32 0.0, %v416
  %v418 = vpop.f32.mrf.mxu0
  %v419 = vadd.f32 0.0, %v418
  %420 = vmatmul.bf16.gmra.mxu0 %v303
  %v421 = vpop.f32.mrf.mxu0
  %v422 = vadd.f32 0.0, %v421
  %v423 = vpop.f32.mrf.mxu0
  %v424 = vadd.f32 0.0, %v423
  %425 = vmatmul.bf16.gmra.mxu0 %v306
  %v426 = vpop.f32.mrf.mxu0
  %v427 = vadd.f32 0.0, %v426
  %v428 = vpop.f32.mrf.mxu0
  %v429 = vadd.f32 0.0, %v428
  %430 = vmatmul.bf16.gmra.mxu0 %v309
  %v431 = vpop.f32.mrf.mxu0
  %v432 = vadd.f32 0.0, %v431
  %v433 = vpop.f32.mrf.mxu0
  %v434 = vadd.f32 0.0, %v433
  %435 = vmatmul.bf16.gmra.mxu0 %v312
  %v436 = vpop.f32.mrf.mxu0
  %v437 = vadd.f32 0.0, %v436
  %v438 = vpop.f32.mrf.mxu0
  %v439 = vadd.f32 0.0, %v438
  %440 = vmatmul.bf16.gmra.mxu0 %v315
  %v441 = vpop.f32.mrf.mxu0
  %v442 = vadd.f32 0.0, %v441
  %v443 = vpop.f32.mrf.mxu0
  %v444 = vadd.f32 0.0, %v443
  %445 = vmatmul.bf16.gmra.mxu0 %v318
  %v446 = vpop.f32.mrf.mxu0
  %v447 = vadd.f32 0.0, %v446
  %v448 = vpop.f32.mrf.mxu0
  %v449 = vadd.f32 0.0, %v448
  %450 = vmatmul.bf16.gmra.mxu0 %v321
  %v451 = vpop.f32.mrf.mxu0
  %v452 = vadd.f32 0.0, %v451
  %v453 = vpop.f32.mrf.mxu0
  %v454 = vadd.f32 0.0, %v453
  %455 = vmatmul.bf16.gmra.mxu0 %v324
  %v456 = vpop.f32.mrf.mxu0
  %v457 = vadd.f32 0.0, %v456
  %v458 = vpop.f32.mrf.mxu0
  %v459 = vadd.f32 0.0, %v458
  %460 = vmatmul.bf16.gmra.mxu0 %v327
  %v461 = vpop.f32.mrf.mxu0
  %v462 = vadd.f32 0.0, %v461
  %v463 = vpop.f32.mrf.mxu0
  %v464 = vadd.f32 0.0, %v463
  %465 = vmatmul.bf16.gmra.mxu0 %v330
  %v466 = vpop.f32.mrf.mxu0
  %v467 = vadd.f32 0.0, %v466
  %v468 = vpop.f32.mrf.mxu0
  %v469 = vadd.f32 0.0, %v468
  %470 = vmatmul.bf16.gmra.mxu0 %v333
  %v471 = vpop.f32.mrf.mxu0
  %v472 = vadd.f32 0.0, %v471
  %v473 = vpop.f32.mrf.mxu0
  %v474 = vadd.f32 0.0, %v473
  %475 = vmatmul.bf16.gmra.mxu0 %v336
  %v476 = vpop.f32.mrf.mxu0
  %v477 = vadd.f32 0.0, %v476
  %v478 = vpop.f32.mrf.mxu0
  %v479 = vadd.f32 0.0, %v478
  %480 = vmatmul.bf16.gmra.mxu0 %v339
  %v481 = vpop.f32.mrf.mxu0
  %v482 = vadd.f32 0.0, %v481
  %v483 = vpop.f32.mrf.mxu0
  %v484 = vadd.f32 0.0, %v483
  %485 = vmatmul.bf16.gmra.mxu0 %v342
  %v486 = vpop.f32.mrf.mxu0
  %v487 = vadd.f32 0.0, %v486
  %v488 = vpop.f32.mrf.mxu0
  %v489 = vadd.f32 0.0, %v488
  %490 = vmatmul.bf16.gmra.mxu0 %v345
  %v491 = vpop.f32.mrf.mxu0
  %v492 = vadd.f32 0.0, %v491
  %v493 = vpop.f32.mrf.mxu0
  %v494 = vadd.f32 0.0, %v493
  %495 = vmatmul.bf16.gmra.mxu0 %v348
  %v496 = vpop.f32.mrf.mxu0
  %v497 = vadd.f32 0.0, %v496
  %v498 = vpop.f32.mrf.mxu0
  %v499 = vadd.f32 0.0, %v498
  %500 = vmatmul.bf16.gmra.mxu0 %v351
  %v501 = vpop.f32.mrf.mxu0
  %v502 = vadd.f32 0.0, %v501
  %v503 = vpop.f32.mrf.mxu0
  %v504 = vadd.f32 0.0, %v503
  %505 = vmatmul.bf16.gmra.mxu0 %v354
  %v506 = vpop.f32.mrf.mxu0
  %v507 = vadd.f32 0.0, %v506
  %v508 = vpop.f32.mrf.mxu0
  %v509 = vadd.f32 0.0, %v508
  %510 = vmatmul.bf16.gmra.mxu0 %v357
  %v511 = vpop.f32.mrf.mxu0
  %v512 = vadd.f32 0.0, %v511
  %v513 = vpop.f32.mrf.mxu0
  %v514 = vadd.f32 0.0, %v513
  %515 = vmatmul.bf16.gmra.mxu0 %v360
  %v516 = vpop.f32.mrf.mxu0
  %v517 = vadd.f32 0.0, %v516
  %v518 = vpop.f32.mrf.mxu0
  %v519 = vadd.f32 0.0, %v518
  %520 = vmatmul.bf16.gmra.mxu0 %v363
  %v521 = vpop.f32.mrf.mxu0
  %v522 = vadd.f32 0.0, %v521
  %v523 = vpop.f32.mrf.mxu0
  %v524 = vadd.f32 0.0, %v523
  %525 = vmatmul.bf16.gmra.mxu0 %v366
  %v526 = vpop.f32.mrf.mxu0
  %v527 = vadd.f32 0.0, %v526
  %v528 = vpop.f32.mrf.mxu0
  %v529 = vadd.f32 0.0, %v528
  %530 = vmatmul.bf16.gmra.mxu0 %v369
  %v531 = vpop.f32.mrf.mxu0
  %v532 = vadd.f32 0.0, %v531
  %v533 = vpop.f32.mrf.mxu0
  %v534 = vadd.f32 0.0, %v533
  %535 = vmatmul.bf16.gmra.mxu0 %v372
  %v536 = vpop.f32.mrf.mxu0
  %v537 = vadd.f32 0.0, %v536
  %v538 = vpop.f32.mrf.mxu0
  %v539 = vadd.f32 0.0, %v538
  %540 = vmatmul.bf16.gmra.mxu0 %v375
  %v541 = vpop.f32.mrf.mxu0
  %v542 = vadd.f32 0.0, %v541
  %v543 = vpop.f32.mrf.mxu0
  %v544 = vadd.f32 0.0, %v543
  %545 = vmatmul.bf16.gmra.mxu0 %v378
  %v546 = vpop.f32.mrf.mxu0
  %v547 = vadd.f32 0.0, %v546
  %v548 = vpop.f32.mrf.mxu0
  %v549 = vadd.f32 0.0, %v548
  %550 = vmatmul.bf16.gmra.mxu0 %v381
  %v551 = vpop.f32.mrf.mxu0
  %v552 = vadd.f32 0.0, %v551
  %v553 = vpop.f32.mrf.mxu0
  %v554 = vadd.f32 0.0, %v553
  %555 = vdwg.mxu0
  %v556 = vld [vmem:[%s2] sm:$0xff]
  %v557 = vadd.f32 %v397, %v399
  %v558 = vadd.f32 %v557, %v402
  %v559 = vadd.f32 %v558, %v404
  %v560 = vadd.f32 %v559, %v407
  %v561 = vadd.f32 %v560, %v409
  %v562 = vadd.f32 %v561, %v412
  %v563 = vadd.f32 %v562, %v414
  %v564 = vadd.f32 %v563, %v417
  %v565 = vadd.f32 %v564, %v419
  %v566 = vadd.f32 %v565, %v422
  %v567 = vadd.f32 %v566, %v424
  %v568 = vadd.f32 %v567, %v427
  %v569 = vadd.f32 %v568, %v429
  %v570 = vadd.f32 %v569, %v432
  %v571 = vadd.f32 %v570, %v434
  %v572 = vadd.f32 %v571, %v437
  %v573 = vadd.f32 %v572, %v439
  %v574 = vadd.f32 %v573, %v442
  %v575 = vadd.f32 %v574, %v444
  %v576 = vadd.f32 %v575, %v447
  %v577 = vadd.f32 %v576, %v449
  %v578 = vadd.f32 %v577, %v452
  %v579 = vadd.f32 %v578, %v454
  %v580 = vadd.f32 %v579, %v457
  %v581 = vadd.f32 %v580, %v459
  %v582 = vadd.f32 %v581, %v462
  %v583 = vadd.f32 %v582, %v464
  %v584 = vadd.f32 %v583, %v467
  %v585 = vadd.f32 %v584, %v469
  %v586 = vadd.f32 %v585, %v472
  %v587 = vadd.f32 %v586, %v474
  %v588 = vadd.f32 %v587, %v477
  %v589 = vadd.f32 %v588, %v479
  %v590 = vadd.f32 %v589, %v482
  %v591 = vadd.f32 %v590, %v484
  %v592 = vadd.f32 %v591, %v487
  %v593 = vadd.f32 %v592, %v489
  %v594 = vadd.f32 %v593, %v492
  %v595 = vadd.f32 %v594, %v494
  %v596 = vadd.f32 %v595, %v497
  %v597 = vadd.f32 %v596, %v499
  %v598 = vadd.f32 %v597, %v502
  %v599 = vadd.f32 %v598, %v504
  %v600 = vadd.f32 %v599, %v507
  %v601 = vadd.f32 %v600, %v509
  %v602 = vadd.f32 %v601, %v512
  %v603 = vadd.f32 %v602, %v514
  %v604 = vadd.f32 %v603, %v517
  %v605 = vadd.f32 %v604, %v519
  %v606 = vadd.f32 %v605, %v522
  %v607 = vadd.f32 %v606, %v524
  %v608 = vadd.f32 %v607, %v527
  %v609 = vadd.f32 %v608, %v529
  %v610 = vadd.f32 %v609, %v532
  %v611 = vadd.f32 %v610, %v534
  %v612 = vadd.f32 %v611, %v537
  %v613 = vadd.f32 %v612, %v539
  %v614 = vadd.f32 %v613, %v542
  %v615 = vadd.f32 %v614, %v544
  %v616 = vadd.f32 %v615, %v547
  %v617 = vadd.f32 %v616, %v549
  %v618 = vadd.f32 %v617, %v552
  %v619 = vadd.f32 %v618, %v554
  %v620 = vadd.f32 %v556, %v619
  %621 = vst [vmem:[%s2] sm:$0xff] %v620
  %v622 = vld [vmem:[%s3] sm:$0xff]
  %v623 = vmul.f32 %v397, %v397
  %v624 = vmul.f32 %v399, %v399
  %v625 = vmul.f32 %v402, %v402
  %v626 = vmul.f32 %v404, %v404
  %v627 = vmul.f32 %v407, %v407
  %v628 = vmul.f32 %v409, %v409
  %v629 = vmul.f32 %v412, %v412
  %v630 = vmul.f32 %v414, %v414
  %v631 = vmul.f32 %v417, %v417
  %v632 = vmul.f32 %v419, %v419
  %v633 = vmul.f32 %v422, %v422
  %v634 = vmul.f32 %v424, %v424
  %v635 = vmul.f32 %v427, %v427
  %v636 = vmul.f32 %v429, %v429
  %v637 = vmul.f32 %v432, %v432
  %v638 = vmul.f32 %v434, %v434
  %v639 = vmul.f32 %v437, %v437
  %v640 = vmul.f32 %v439, %v439
  %v641 = vmul.f32 %v442, %v442
  %v642 = vmul.f32 %v444, %v444
  %v643 = vmul.f32 %v447, %v447
  %v644 = vmul.f32 %v449, %v449
  %v645 = vmul.f32 %v452, %v452
  %v646 = vmul.f32 %v454, %v454
  %v647 = vmul.f32 %v457, %v457
  %v648 = vmul.f32 %v459, %v459
  %v649 = vmul.f32 %v462, %v462
  %v650 = vmul.f32 %v464, %v464
  %v651 = vmul.f32 %v467, %v467
  %v652 = vmul.f32 %v469, %v469
  %v653 = vmul.f32 %v472, %v472
  %v654 = vmul.f32 %v474, %v474
  %v655 = vmul.f32 %v477, %v477
  %v656 = vmul.f32 %v479, %v479
  %v657 = vmul.f32 %v482, %v482
  %v658 = vmul.f32 %v484, %v484
  %v659 = vmul.f32 %v487, %v487
  %v660 = vmul.f32 %v489, %v489
  %v661 = vmul.f32 %v492, %v492
  %v662 = vmul.f32 %v494, %v494
  %v663 = vmul.f32 %v497, %v497
  %v664 = vmul.f32 %v499, %v499
  %v665 = vmul.f32 %v502, %v502
  %v666 = vmul.f32 %v504, %v504
  %v667 = vmul.f32 %v507, %v507
  %v668 = vmul.f32 %v509, %v509
  %v669 = vmul.f32 %v512, %v512
  %v670 = vmul.f32 %v514, %v514
  %v671 = vmul.f32 %v517, %v517
  %v672 = vmul.f32 %v519, %v519
  %v673 = vmul.f32 %v522, %v522
  %v674 = vmul.f32 %v524, %v524
  %v675 = vmul.f32 %v527, %v527
  %v676 = vmul.f32 %v529, %v529
  %v677 = vmul.f32 %v532, %v532
  %v678 = vmul.f32 %v534, %v534
  %v679 = vmul.f32 %v537, %v537
  %v680 = vmul.f32 %v539, %v539
  %v681 = vmul.f32 %v542, %v542
  %v682 = vmul.f32 %v544, %v544
  %v683 = vmul.f32 %v547, %v547
  %v684 = vmul.f32 %v549, %v549
  %v685 = vmul.f32 %v552, %v552
  %v686 = vmul.f32 %v554, %v554
  %v687 = vadd.f32 %v623, %v624
  %v688 = vadd.f32 %v687, %v625
  %v689 = vadd.f32 %v688, %v626
  %v690 = vadd.f32 %v689, %v627
  %v691 = vadd.f32 %v690, %v628
  %v692 = vadd.f32 %v691, %v629
  %v693 = vadd.f32 %v692, %v630
  %v694 = vadd.f32 %v693, %v631
  %v695 = vadd.f32 %v694, %v632
  %v696 = vadd.f32 %v695, %v633
  %v697 = vadd.f32 %v696, %v634
  %v698 = vadd.f32 %v697, %v635
  %v699 = vadd.f32 %v698, %v636
  %v700 = vadd.f32 %v699, %v637
  %v701 = vadd.f32 %v700, %v638
  %v702 = vadd.f32 %v701, %v639
  %v703 = vadd.f32 %v702, %v640
  %v704 = vadd.f32 %v703, %v641
  %v705 = vadd.f32 %v704, %v642
  %v706 = vadd.f32 %v705, %v643
  %v707 = vadd.f32 %v706, %v644
  %v708 = vadd.f32 %v707, %v645
  %v709 = vadd.f32 %v708, %v646
  %v710 = vadd.f32 %v709, %v647
  %v711 = vadd.f32 %v710, %v648
  %v712 = vadd.f32 %v711, %v649
  %v713 = vadd.f32 %v712, %v650
  %v714 = vadd.f32 %v713, %v651
  %v715 = vadd.f32 %v714, %v652
  %v716 = vadd.f32 %v715, %v653
  %v717 = vadd.f32 %v716, %v654
  %v718 = vadd.f32 %v717, %v655
  %v719 = vadd.f32 %v718, %v656
  %v720 = vadd.f32 %v719, %v657
  %v721 = vadd.f32 %v720, %v658
  %v722 = vadd.f32 %v721, %v659
  %v723 = vadd.f32 %v722, %v660
  %v724 = vadd.f32 %v723, %v661
  %v725 = vadd.f32 %v724, %v662
  %v726 = vadd.f32 %v725, %v663
  %v727 = vadd.f32 %v726, %v664
  %v728 = vadd.f32 %v727, %v665
  %v729 = vadd.f32 %v728, %v666
  %v730 = vadd.f32 %v729, %v667
  %v731 = vadd.f32 %v730, %v668
  %v732 = vadd.f32 %v731, %v669
  %v733 = vadd.f32 %v732, %v670
  %v734 = vadd.f32 %v733, %v671
  %v735 = vadd.f32 %v734, %v672
  %v736 = vadd.f32 %v735, %v673
  %v737 = vadd.f32 %v736, %v674
  %v738 = vadd.f32 %v737, %v675
  %v739 = vadd.f32 %v738, %v676
  %v740 = vadd.f32 %v739, %v677
  %v741 = vadd.f32 %v740, %v678
  %v742 = vadd.f32 %v741, %v679
  %v743 = vadd.f32 %v742, %v680
  %v744 = vadd.f32 %v743, %v681
  %v745 = vadd.f32 %v744, %v682
  %v746 = vadd.f32 %v745, %v683
  %v747 = vadd.f32 %v746, %v684
  %v748 = vadd.f32 %v747, %v685
  %v749 = vadd.f32 %v748, %v686
  %v750 = vadd.f32 %v622, %v749
  %751 = vst [vmem:[%s3] sm:$0xff] %v750
  // Predicated region
  $region14: #{block_forward.2} parent=0 // pred_check
    _
  $region15: #{block_forward.2} parent=0 // pred_check_branch
    %753 = sbr.rel (0) target = $region17
  $region16: #{block_forward.2} parent=0 // pred_region
    _
  $region17: #{block_forward.2} parent=0 // pred_fallthru
    _
  // Predicated region
  $region18: #{block_forward.2} parent=0 // pred_check
    _
  $region19: #{block_forward.2} parent=0 // pred_check_branch
    %755 = sbr.rel (0) target = $region21
  $region20: #{block_forward.2} parent=0 // pred_region
    _
  $region21: #{block_forward.2} parent=0 // pred_fallthru
    _
  // Predicated region
  $region22: #{block_forward.2} parent=0 // pred_check
    _
  $region23: #{block_forward.2} parent=0 // pred_check_branch
    %757 = sbr.rel (0) target = $region25
  $region24: #{block_forward.2} parent=0 // pred_region
    _
  $region25: #{block_forward.2} parent=0 // pred_fallthru
    _
  // Predicated region
  $region26: #{block_forward.2} parent=0 // pred_check
    _
  $region27: #{block_forward.2} parent=0 // pred_check_branch
    %759 = sbr.rel (0) target = $region29
  $region28: #{block_forward.2} parent=0 // pred_region
    _
  $region29: #{block_forward.2} parent=0 // pred_fallthru
    _

// kernel: block_forward.3
$region0: #{block_forward.3}
  #allocation0 [shape = 'u32[]', space=smem, size = 0x4, offset = 0x4, fixed_abs, tag = 'smem constant byte address 0x4 - core index']
  #allocation1 [shape = 'u32[72,128]{1,0:T(1,128)}', space=vmem, size = 0x9000, scoped, tag = 'internal scratch']
  %s0 = inlined_call_operand.vmem [shape: bf16[512,36], index: 0, kind: input, shape index: {}]
  %s1 = inlined_call_operand.vmem [shape: bf16[36,128], index: 1, kind: input, shape index: {}]
  %s2 = inlined_call_operand.vmem [shape: f32[1,128], index: 2, kind: input, shape index: {}]
  %s3 = inlined_call_operand.vmem [shape: f32[1,128], index: 3, kind: input, shape index: {}]
  %s4 = inlined_call_operand.vmem [shape: bf16[2,64,128], index: 4, kind: output, shape index: {}]
  %s5 = sld [smem:[#allocation0]]
  $region26: #{block_forward.3} parent=0
    _
  %s7 = ssub.s32 1, %s5
  %s8 = scalar_select 0, %s7, %s5
  // Predicated region
  $region2: #{block_forward.3} parent=0 // pred_check
    _
  $region3: #{block_forward.3} parent=0 // pred_check_branch
    %10 = sbr.rel (0) target = $region5
  $region4: #{block_forward.3} parent=0 // pred_region
    _
  $region5: #{block_forward.3} parent=0 // pred_fallthru
    _
  // Predicated region
  $region6: #{block_forward.3} parent=0 // pred_check
    _
  $region7: #{block_forward.3} parent=0 // pred_check_branch
    %12 = sbr.rel (0) target = $region9
  $region8: #{block_forward.3} parent=0 // pred_region
    _
  $region9: #{block_forward.3} parent=0 // pred_fallthru
    _
  // Predicated region
  $region10: #{block_forward.3} parent=0 // pred_check
    _
  $region11: #{block_forward.3} parent=0 // pred_check_branch
    %14 = sbr.rel (0) target = $region13
  $region12: #{block_forward.3} parent=0 // pred_region
    _
  $region13: #{block_forward.3} parent=0 // pred_fallthru
    _
  // Predicated region
  $region14: #{block_forward.3} parent=0 // pred_check
    _
  $region15: #{block_forward.3} parent=0 // pred_check_branch
    %16 = sbr.rel (0) target = $region17
  $region16: #{block_forward.3} parent=0 // pred_region
    _
  $region17: #{block_forward.3} parent=0 // pred_fallthru
    _
  %v18 = vld [vmem:[%s0] sm:$0xf]
  %v19 = vld [vmem:[%s0 + $0x4] sm:$0xf]
  %v20 = vld [vmem:[%s0 + $0x8] sm:$0xf]
  %v21 = vld [vmem:[%s0 + $0xc] sm:$0xf]
  %v22 = vld [vmem:[%s0 + $0x10] sm:$0xf]
  %v23 = vld [vmem:[%s0 + $0x14] sm:$0xf]
  %v24 = vld [vmem:[%s0 + $0x18] sm:$0xf]
  %v25 = vld [vmem:[%s0 + $0x1c] sm:$0xf]
  %v26 = vld [vmem:[%s0 + $0x20] sm:$0xf]
  %v27 = vld [vmem:[%s0 + $0x24] sm:$0xf]
  %v28 = vld [vmem:[%s0 + $0x28] sm:$0xf]
  %v29 = vld [vmem:[%s0 + $0x2c] sm:$0xf]
  %v30 = vld [vmem:[%s0 + $0x30] sm:$0xf]
  %v31 = vld [vmem:[%s0 + $0x34] sm:$0xf]
  %v32 = vld [vmem:[%s0 + $0x38] sm:$0xf]
  %v33 = vld [vmem:[%s0 + $0x3c] sm:$0xf]
  %v34 = vld [vmem:[%s0 + $0x40] sm:$0xf]
  %v35 = vld [vmem:[%s0 + $0x44] sm:$0xf]
  %v36 = vld [vmem:[%s0 + $0x48] sm:$0xf]
  %v37 = vld [vmem:[%s0 + $0x4c] sm:$0xf]
  %v38 = vld [vmem:[%s0 + $0x50] sm:$0xf]
  %v39 = vld [vmem:[%s0 + $0x54] sm:$0xf]
  %v40 = vld [vmem:[%s0 + $0x58] sm:$0xf]
  %v41 = vld [vmem:[%s0 + $0x5c] sm:$0xf]
  %v42 = vld [vmem:[%s0 + $0x60] sm:$0xf]
  %v43 = vld [vmem:[%s0 + $0x64] sm:$0xf]
  %v44 = vld [vmem:[%s0 + $0x68] sm:$0xf]
  %v45 = vld [vmem:[%s0 + $0x6c] sm:$0xf]
  %v46 = vld [vmem:[%s0 + $0x70] sm:$0xf]
  %v47 = vld [vmem:[%s0 + $0x74] sm:$0xf]
  %v48 = vld [vmem:[%s0 + $0x78] sm:$0xf]
  %v49 = vld [vmem:[%s0 + $0x7c] sm:$0xf]
  %v50 = vld [vmem:[%s0 + $0x80] sm:$0xf]
  %v51 = vld [vmem:[%s0 + $0x84] sm:$0xf]
  %v52 = vld [vmem:[%s0 + $0x88] sm:$0xf]
  %v53 = vld [vmem:[%s0 + $0x8c] sm:$0xf]
  %v54 = vld [vmem:[%s0 + $0x90] sm:$0xf]
  %v55 = vld [vmem:[%s0 + $0x94] sm:$0xf]
  %v56 = vld [vmem:[%s0 + $0x98] sm:$0xf]
  %v57 = vld [vmem:[%s0 + $0x9c] sm:$0xf]
  %v58 = vld [vmem:[%s0 + $0xa0] sm:$0xf]
  %v59 = vld [vmem:[%s0 + $0xa4] sm:$0xf]
  %v60 = vld [vmem:[%s0 + $0xa8] sm:$0xf]
  %v61 = vld [vmem:[%s0 + $0xac] sm:$0xf]
  %v62 = vld [vmem:[%s0 + $0xb0] sm:$0xf]
  %v63 = vld [vmem:[%s0 + $0xb4] sm:$0xf]
  %v64 = vld [vmem:[%s0 + $0xb8] sm:$0xf]
  %v65 = vld [vmem:[%s0 + $0xbc] sm:$0xf]
  %v66 = vld [vmem:[%s0 + $0xc0] sm:$0xf]
  %v67 = vld [vmem:[%s0 + $0xc4] sm:$0xf]
  %v68 = vld [vmem:[%s0 + $0xc8] sm:$0xf]
  %v69 = vld [vmem:[%s0 + $0xcc] sm:$0xf]
  %v70 = vld [vmem:[%s0 + $0xd0] sm:$0xf]
  %v71 = vld [vmem:[%s0 + $0xd4] sm:$0xf]
  %v72 = vld [vmem:[%s0 + $0xd8] sm:$0xf]
  %v73 = vld [vmem:[%s0 + $0xdc] sm:$0xf]
  %v74 = vld [vmem:[%s0 + $0xe0] sm:$0xf]
  %v75 = vld [vmem:[%s0 + $0xe4] sm:$0xf]
  %v76 = vld [vmem:[%s0 + $0xe8] sm:$0xf]
  %v77 = vld [vmem:[%s0 + $0xec] sm:$0xf]
  %v78 = vld [vmem:[%s0 + $0xf0] sm:$0xf]
  %v79 = vld [vmem:[%s0 + $0xf4] sm:$0xf]
  %v80 = vld [vmem:[%s0 + $0xf8] sm:$0xf]
  %v81 = vld [vmem:[%s0 + $0xfc] sm:$0xf]
  %v82 = vld [vmem:[%s1] sm:$0xf]
  %v83 = vld [vmem:[%s1 + $0x4] sm:$0xf]
  %v84 = vld [vmem:[%s1 + $0x8] sm:$0xf]
  %v85 = vld [vmem:[%s1 + $0xc] sm:$0xf]
  %v86 = vld [vmem:[%s1 + $0x10] sm:$0x3]
  %v151 = vunpack.c.l.b16 %v18
  %v152 = vunpack.c.l.b16 %v19
  %v153 = vunpack.c.l.b16 %v20
  %v154 = vunpack.c.l.b16 %v21
  %v155 = vunpack.c.l.b16 %v22
  %v156 = vunpack.c.l.b16 %v23
  %v157 = vunpack.c.l.b16 %v24
  %v158 = vunpack.c.l.b16 %v25
  %v159 = vunpack.c.l.b16 %v26
  %v160 = vunpack.c.l.b16 %v27
  %v161 = vunpack.c.l.b16 %v28
  %v162 = vunpack.c.l.b16 %v29
  %v163 = vunpack.c.l.b16 %v30
  %v164 = vunpack.c.l.b16 %v31
  %v165 = vunpack.c.l.b16 %v32
  %v166 = vunpack.c.l.b16 %v33
  %v167 = vunpack.c.l.b16 %v34
  %v168 = vunpack.c.l.b16 %v35
  %v169 = vunpack.c.l.b16 %v36
  %v170 = vunpack.c.l.b16 %v37
  %v171 = vunpack.c.l.b16 %v38
  %v172 = vunpack.c.l.b16 %v39
  %v173 = vunpack.c.l.b16 %v40
  %v174 = vunpack.c.l.b16 %v41
  %v175 = vunpack.c.l.b16 %v42
  %v176 = vunpack.c.l.b16 %v43
  %v177 = vunpack.c.l.b16 %v44
  %v178 = vunpack.c.l.b16 %v45
  %v179 = vunpack.c.l.b16 %v46
  %v180 = vunpack.c.l.b16 %v47
  %v181 = vunpack.c.l.b16 %v48
  %v182 = vunpack.c.l.b16 %v49
  %v183 = vunpack.c.l.b16 %v50
  %v184 = vunpack.c.l.b16 %v51
  %v185 = vunpack.c.l.b16 %v52
  %v186 = vunpack.c.l.b16 %v53
  %v187 = vunpack.c.l.b16 %v54
  %v188 = vunpack.c.l.b16 %v55
  %v189 = vunpack.c.l.b16 %v56
  %v190 = vunpack.c.l.b16 %v57
  %v191 = vunpack.c.l.b16 %v58
  %v192 = vunpack.c.l.b16 %v59
  %v193 = vunpack.c.l.b16 %v60
  %v194 = vunpack.c.l.b16 %v61
  %v195 = vunpack.c.l.b16 %v62
  %v196 = vunpack.c.l.b16 %v63
  %v197 = vunpack.c.l.b16 %v64
  %v198 = vunpack.c.l.b16 %v65
  %v199 = vunpack.c.l.b16 %v66
  %v200 = vunpack.c.l.b16 %v67
  %v201 = vunpack.c.l.b16 %v68
  %v202 = vunpack.c.l.b16 %v69
  %v203 = vunpack.c.l.b16 %v70
  %v204 = vunpack.c.l.b16 %v71
  %v205 = vunpack.c.l.b16 %v72
  %v206 = vunpack.c.l.b16 %v73
  %v207 = vunpack.c.l.b16 %v74
  %v208 = vunpack.c.l.b16 %v75
  %v209 = vunpack.c.l.b16 %v76
  %v210 = vunpack.c.l.b16 %v77
  %v211 = vunpack.c.l.b16 %v78
  %v212 = vunpack.c.l.b16 %v79
  %v213 = vunpack.c.l.b16 %v80
  %v214 = vunpack.c.l.b16 %v81
  %v215 = vpack.c.b16 %v152, %v151
  %v216 = vpack.c.b16 %v154, %v153
  %v217 = vpack.c.b16 %v156, %v155
  %v218 = vpack.c.b16 %v158, %v157
  %v219 = vpack.c.b16 %v160, %v159
  %v220 = vpack.c.b16 %v162, %v161
  %v221 = vpack.c.b16 %v164, %v163
  %v222 = vpack.c.b16 %v166, %v165
  %v223 = vpack.c.b16 %v168, %v167
  %v224 = vpack.c.b16 %v170, %v169
  %v225 = vpack.c.b16 %v172, %v171
  %v226 = vpack.c.b16 %v174, %v173
  %v227 = vpack.c.b16 %v176, %v175
  %v228 = vpack.c.b16 %v178, %v177
  %v229 = vpack.c.b16 %v180, %v179
  %v230 = vpack.c.b16 %v182, %v181
  %v231 = vpack.c.b16 %v184, %v183
  %v232 = vpack.c.b16 %v186, %v185
  %v233 = vpack.c.b16 %v188, %v187
  %v234 = vpack.c.b16 %v190, %v189
  %v235 = vpack.c.b16 %v192, %v191
  %v236 = vpack.c.b16 %v194, %v193
  %v237 = vpack.c.b16 %v196, %v195
  %v238 = vpack.c.b16 %v198, %v197
  %v239 = vpack.c.b16 %v200, %v199
  %v240 = vpack.c.b16 %v202, %v201
  %v241 = vpack.c.b16 %v204, %v203
  %v242 = vpack.c.b16 %v206, %v205
  %v243 = vpack.c.b16 %v208, %v207
  %v244 = vpack.c.b16 %v210, %v209
  %v245 = vpack.c.b16 %v212, %v211
  %v246 = vpack.c.b16 %v214, %v213
  %v252 = vunpack.c.l.b16 %v82
  %v253 = vunpack.c.l.b16 %v83
  %v254 = vunpack.c.l.b16 %v84
  %v255 = vunpack.c.l.b16 %v85
  %v256 = vunpack.c.l.b16 %v86
  %v257 = vpack.c.b16 %v253, %v252
  %v258 = vpack.c.b16 %v255, %v254
  %v259 = vpack.c.b16 %v256, %v256
  %vm262 = vcmask 293888
  %v264 = vsel %vm262, %v215, 0
  %v267 = vsel %vm262, %v216, 0
  %v270 = vsel %vm262, %v217, 0
  %v273 = vsel %vm262, %v218, 0
  %v276 = vsel %vm262, %v219, 0
  %v279 = vsel %vm262, %v220, 0
  %v282 = vsel %vm262, %v221, 0
  %v285 = vsel %vm262, %v222, 0
  %v288 = vsel %vm262, %v223, 0
  %v291 = vsel %vm262, %v224, 0
  %v294 = vsel %vm262, %v225, 0
  %v297 = vsel %vm262, %v226, 0
  %v300 = vsel %vm262, %v227, 0
  %v303 = vsel %vm262, %v228, 0
  %v306 = vsel %vm262, %v229, 0
  %v309 = vsel %vm262, %v230, 0
  %v312 = vsel %vm262, %v231, 0
  %v315 = vsel %vm262, %v232, 0
  %v318 = vsel %vm262, %v233, 0
  %v321 = vsel %vm262, %v234, 0
  %v324 = vsel %vm262, %v235, 0
  %v327 = vsel %vm262, %v236, 0
  %v330 = vsel %vm262, %v237, 0
  %v333 = vsel %vm262, %v238, 0
  %v336 = vsel %vm262, %v239, 0
  %v339 = vsel %vm262, %v240, 0
  %v342 = vsel %vm262, %v241, 0
  %v345 = vsel %vm262, %v242, 0
  %v348 = vsel %vm262, %v243, 0
  %v351 = vsel %vm262, %v244, 0
  %v354 = vsel %vm262, %v245, 0
  %v357 = vsel %vm262, %v246, 0
  %vm359 = vcmask 1041408
  %v361 = vsel %vm359, %v259, 0
  %363 = vmatpush.bf16.msra.mxu0 0
  %364 = vmatpush.bf16.msra.mxu0 0
  %365 = vmatpush.bf16.msra.mxu0 0
  %366 = vmatpush.bf16.msra.mxu0 0
  %367 = vmatpush.bf16.msra.mxu0 0
  %368 = vmatpush.bf16.msra.mxu0 %v361
  %369 = vmatpush.bf16.msra.mxu0 %v258
  %370 = vmatpush.bf16.msra.mxu0 %v257
  %371 = vmatmul.bf16.gmra.mxu0 %v264
  %v372 = vpop.f32.mrf.mxu0
  %v373 = vadd.f32 0.0, %v372
  %v374 = vpop.f32.mrf.mxu0
  %v375 = vadd.f32 0.0, %v374
  %376 = vmatmul.bf16.gmra.mxu0 %v267
  %v377 = vpop.f32.mrf.mxu0
  %v378 = vadd.f32 0.0, %v377
  %v379 = vpop.f32.mrf.mxu0
  %v380 = vadd.f32 0.0, %v379
  %381 = vmatmul.bf16.gmra.mxu0 %v270
  %v382 = vpop.f32.mrf.mxu0
  %v383 = vadd.f32 0.0, %v382
  %v384 = vpop.f32.mrf.mxu0
  %v385 = vadd.f32 0.0, %v384
  %386 = vmatmul.bf16.gmra.mxu0 %v273
  %v387 = vpop.f32.mrf.mxu0
  %v388 = vadd.f32 0.0, %v387
  %v389 = vpop.f32.mrf.mxu0
  %v390 = vadd.f32 0.0, %v389
  %391 = vmatmul.bf16.gmra.mxu0 %v276
  %v392 = vpop.f32.mrf.mxu0
  %v393 = vadd.f32 0.0, %v392
  %v394 = vpop.f32.mrf.mxu0
  %v395 = vadd.f32 0.0, %v394
  %396 = vmatmul.bf16.gmra.mxu0 %v279
  %v397 = vpop.f32.mrf.mxu0
  %v398 = vadd.f32 0.0, %v397
  %v399 = vpop.f32.mrf.mxu0
  %v400 = vadd.f32 0.0, %v399
  %401 = vmatmul.bf16.gmra.mxu0 %v282
  %v402 = vpop.f32.mrf.mxu0
  %v403 = vadd.f32 0.0, %v402
  %v404 = vpop.f32.mrf.mxu0
  %v405 = vadd.f32 0.0, %v404
  %406 = vmatmul.bf16.gmra.mxu0 %v285
  %v407 = vpop.f32.mrf.mxu0
  %v408 = vadd.f32 0.0, %v407
  %v409 = vpop.f32.mrf.mxu0
  %v410 = vadd.f32 0.0, %v409
  %411 = vmatmul.bf16.gmra.mxu0 %v288
  %v412 = vpop.f32.mrf.mxu0
  %v413 = vadd.f32 0.0, %v412
  %v414 = vpop.f32.mrf.mxu0
  %v415 = vadd.f32 0.0, %v414
  %416 = vmatmul.bf16.gmra.mxu0 %v291
  %v417 = vpop.f32.mrf.mxu0
  %v418 = vadd.f32 0.0, %v417
  %v419 = vpop.f32.mrf.mxu0
  %v420 = vadd.f32 0.0, %v419
  %421 = vmatmul.bf16.gmra.mxu0 %v294
  %v422 = vpop.f32.mrf.mxu0
  %v423 = vadd.f32 0.0, %v422
  %v424 = vpop.f32.mrf.mxu0
  %v425 = vadd.f32 0.0, %v424
  %426 = vmatmul.bf16.gmra.mxu0 %v297
  %v427 = vpop.f32.mrf.mxu0
  %v428 = vadd.f32 0.0, %v427
  %v429 = vpop.f32.mrf.mxu0
  %v430 = vadd.f32 0.0, %v429
  %431 = vmatmul.bf16.gmra.mxu0 %v300
  %v432 = vpop.f32.mrf.mxu0
  %v433 = vadd.f32 0.0, %v432
  %v434 = vpop.f32.mrf.mxu0
  %v435 = vadd.f32 0.0, %v434
  %436 = vmatmul.bf16.gmra.mxu0 %v303
  %v437 = vpop.f32.mrf.mxu0
  %v438 = vadd.f32 0.0, %v437
  %v439 = vpop.f32.mrf.mxu0
  %v440 = vadd.f32 0.0, %v439
  %441 = vmatmul.bf16.gmra.mxu0 %v306
  %v442 = vpop.f32.mrf.mxu0
  %v443 = vadd.f32 0.0, %v442
  %v444 = vpop.f32.mrf.mxu0
  %v445 = vadd.f32 0.0, %v444
  %446 = vmatmul.bf16.gmra.mxu0 %v309
  %v447 = vpop.f32.mrf.mxu0
  %v448 = vadd.f32 0.0, %v447
  %v449 = vpop.f32.mrf.mxu0
  %v450 = vadd.f32 0.0, %v449
  %451 = vmatmul.bf16.gmra.mxu0 %v312
  %v452 = vpop.f32.mrf.mxu0
  %v453 = vadd.f32 0.0, %v452
  %v454 = vpop.f32.mrf.mxu0
  %v455 = vadd.f32 0.0, %v454
  %456 = vmatmul.bf16.gmra.mxu0 %v315
  %v457 = vpop.f32.mrf.mxu0
  %v458 = vadd.f32 0.0, %v457
  %v459 = vpop.f32.mrf.mxu0
  %v460 = vadd.f32 0.0, %v459
  %461 = vmatmul.bf16.gmra.mxu0 %v318
  %v462 = vpop.f32.mrf.mxu0
  %v463 = vadd.f32 0.0, %v462
  %v464 = vpop.f32.mrf.mxu0
  %v465 = vadd.f32 0.0, %v464
  %466 = vmatmul.bf16.gmra.mxu0 %v321
  %v467 = vpop.f32.mrf.mxu0
  %v468 = vadd.f32 0.0, %v467
  %v469 = vpop.f32.mrf.mxu0
  %v470 = vadd.f32 0.0, %v469
  %471 = vmatmul.bf16.gmra.mxu0 %v324
  %v472 = vpop.f32.mrf.mxu0
  %v473 = vadd.f32 0.0, %v472
  %v474 = vpop.f32.mrf.mxu0
  %v475 = vadd.f32 0.0, %v474
  %476 = vmatmul.bf16.gmra.mxu0 %v327
  %v477 = vpop.f32.mrf.mxu0
  %v478 = vadd.f32 0.0, %v477
  %v479 = vpop.f32.mrf.mxu0
  %v480 = vadd.f32 0.0, %v479
  %481 = vmatmul.bf16.gmra.mxu0 %v330
  %v482 = vpop.f32.mrf.mxu0
  %v483 = vadd.f32 0.0, %v482
  %v484 = vpop.f32.mrf.mxu0
  %v485 = vadd.f32 0.0, %v484
  %486 = vmatmul.bf16.gmra.mxu0 %v333
  %v487 = vpop.f32.mrf.mxu0
  %v488 = vadd.f32 0.0, %v487
  %v489 = vpop.f32.mrf.mxu0
  %v490 = vadd.f32 0.0, %v489
  %491 = vmatmul.bf16.gmra.mxu0 %v336
  %v492 = vpop.f32.mrf.mxu0
  %v493 = vadd.f32 0.0, %v492
  %v494 = vpop.f32.mrf.mxu0
  %v495 = vadd.f32 0.0, %v494
  %496 = vmatmul.bf16.gmra.mxu0 %v339
  %v497 = vpop.f32.mrf.mxu0
  %v498 = vadd.f32 0.0, %v497
  %v499 = vpop.f32.mrf.mxu0
  %v500 = vadd.f32 0.0, %v499
  %501 = vmatmul.bf16.gmra.mxu0 %v342
  %v502 = vpop.f32.mrf.mxu0
  %v503 = vadd.f32 0.0, %v502
  %v504 = vpop.f32.mrf.mxu0
  %v505 = vadd.f32 0.0, %v504
  %506 = vmatmul.bf16.gmra.mxu0 %v345
  %v507 = vpop.f32.mrf.mxu0
  %v508 = vadd.f32 0.0, %v507
  %v509 = vpop.f32.mrf.mxu0
  %v510 = vadd.f32 0.0, %v509
  %511 = vmatmul.bf16.gmra.mxu0 %v348
  %v512 = vpop.f32.mrf.mxu0
  %v513 = vadd.f32 0.0, %v512
  %v514 = vpop.f32.mrf.mxu0
  %v515 = vadd.f32 0.0, %v514
  %516 = vmatmul.bf16.gmra.mxu0 %v351
  %v517 = vpop.f32.mrf.mxu0
  %v518 = vadd.f32 0.0, %v517
  %v519 = vpop.f32.mrf.mxu0
  %v520 = vadd.f32 0.0, %v519
  %521 = vmatmul.bf16.gmra.mxu0 %v354
  %v522 = vpop.f32.mrf.mxu0
  %v523 = vadd.f32 0.0, %v522
  %v524 = vpop.f32.mrf.mxu0
  %v525 = vadd.f32 0.0, %v524
  %526 = vmatmul.bf16.gmra.mxu0 %v357
  %v527 = vpop.f32.mrf.mxu0
  %v528 = vadd.f32 0.0, %v527
  %v529 = vpop.f32.mrf.mxu0
  %v530 = vadd.f32 0.0, %v529
  %531 = vdwg.mxu0
  %v532 = vld [vmem:[%s2] sm:$0x1]
  %v534 = vperm.slane %v532, 0
  %v536 = vmul.f32 %v373, %v534
  %v537 = vmul.f32 %v375, %v534
  %v538 = vmul.f32 %v378, %v534
  %v539 = vmul.f32 %v380, %v534
  %v540 = vmul.f32 %v383, %v534
  %v541 = vmul.f32 %v385, %v534
  %v542 = vmul.f32 %v388, %v534
  %v543 = vmul.f32 %v390, %v534
  %v544 = vmul.f32 %v393, %v534
  %v545 = vmul.f32 %v395, %v534
  %v546 = vmul.f32 %v398, %v534
  %v547 = vmul.f32 %v400, %v534
  %v548 = vmul.f32 %v403, %v534
  %v549 = vmul.f32 %v405, %v534
  %v550 = vmul.f32 %v408, %v534
  %v551 = vmul.f32 %v410, %v534
  %v552 = vmul.f32 %v413, %v534
  %v553 = vmul.f32 %v415, %v534
  %v554 = vmul.f32 %v418, %v534
  %v555 = vmul.f32 %v420, %v534
  %v556 = vmul.f32 %v423, %v534
  %v557 = vmul.f32 %v425, %v534
  %v558 = vmul.f32 %v428, %v534
  %v559 = vmul.f32 %v430, %v534
  %v560 = vmul.f32 %v433, %v534
  %v561 = vmul.f32 %v435, %v534
  %v562 = vmul.f32 %v438, %v534
  %v563 = vmul.f32 %v440, %v534
  %v564 = vmul.f32 %v443, %v534
  %v565 = vmul.f32 %v445, %v534
  %v566 = vmul.f32 %v448, %v534
  %v567 = vmul.f32 %v450, %v534
  %v568 = vmul.f32 %v453, %v534
  %v569 = vmul.f32 %v455, %v534
  %v570 = vmul.f32 %v458, %v534
  %v571 = vmul.f32 %v460, %v534
  %v572 = vmul.f32 %v463, %v534
  %v573 = vmul.f32 %v465, %v534
  %v574 = vmul.f32 %v468, %v534
  %v575 = vmul.f32 %v470, %v534
  %v576 = vmul.f32 %v473, %v534
  %v577 = vmul.f32 %v475, %v534
  %v578 = vmul.f32 %v478, %v534
  %v579 = vmul.f32 %v480, %v534
  %v580 = vmul.f32 %v483, %v534
  %v581 = vmul.f32 %v485, %v534
  %v582 = vmul.f32 %v488, %v534
  %v583 = vmul.f32 %v490, %v534
  %v584 = vmul.f32 %v493, %v534
  %v585 = vmul.f32 %v495, %v534
  %v586 = vmul.f32 %v498, %v534
  %v587 = vmul.f32 %v500, %v534
  %v588 = vmul.f32 %v503, %v534
  %v589 = vmul.f32 %v505, %v534
  %v590 = vmul.f32 %v508, %v534
  %v591 = vmul.f32 %v510, %v534
  %v592 = vmul.f32 %v513, %v534
  %v593 = vmul.f32 %v515, %v534
  %v594 = vmul.f32 %v518, %v534
  %v595 = vmul.f32 %v520, %v534
  %v596 = vmul.f32 %v523, %v534
  %v597 = vmul.f32 %v525, %v534
  %v598 = vmul.f32 %v528, %v534
  %v599 = vmul.f32 %v530, %v534
  %v600 = vld [vmem:[%s3] sm:$0x1]
  %v602 = vperm.slane %v600, 0
  %v604 = vadd.f32 %v536, %v602
  %v605 = vadd.f32 %v537, %v602
  %v606 = vadd.f32 %v538, %v602
  %v607 = vadd.f32 %v539, %v602
  %v608 = vadd.f32 %v540, %v602
  %v609 = vadd.f32 %v541, %v602
  %v610 = vadd.f32 %v542, %v602
  %v611 = vadd.f32 %v543, %v602
  %v612 = vadd.f32 %v544, %v602
  %v613 = vadd.f32 %v545, %v602
  %v614 = vadd.f32 %v546, %v602
  %v615 = vadd.f32 %v547, %v602
  %v616 = vadd.f32 %v548, %v602
  %v617 = vadd.f32 %v549, %v602
  %v618 = vadd.f32 %v550, %v602
  %v619 = vadd.f32 %v551, %v602
  %v620 = vadd.f32 %v552, %v602
  %v621 = vadd.f32 %v553, %v602
  %v622 = vadd.f32 %v554, %v602
  %v623 = vadd.f32 %v555, %v602
  %v624 = vadd.f32 %v556, %v602
  %v625 = vadd.f32 %v557, %v602
  %v626 = vadd.f32 %v558, %v602
  %v627 = vadd.f32 %v559, %v602
  %v628 = vadd.f32 %v560, %v602
  %v629 = vadd.f32 %v561, %v602
  %v630 = vadd.f32 %v562, %v602
  %v631 = vadd.f32 %v563, %v602
  %v632 = vadd.f32 %v564, %v602
  %v633 = vadd.f32 %v565, %v602
  %v634 = vadd.f32 %v566, %v602
  %v635 = vadd.f32 %v567, %v602
  %v636 = vadd.f32 %v568, %v602
  %v637 = vadd.f32 %v569, %v602
  %v638 = vadd.f32 %v570, %v602
  %v639 = vadd.f32 %v571, %v602
  %v640 = vadd.f32 %v572, %v602
  %v641 = vadd.f32 %v573, %v602
  %v642 = vadd.f32 %v574, %v602
  %v643 = vadd.f32 %v575, %v602
  %v644 = vadd.f32 %v576, %v602
  %v645 = vadd.f32 %v577, %v602
  %v646 = vadd.f32 %v578, %v602
  %v647 = vadd.f32 %v579, %v602
  %v648 = vadd.f32 %v580, %v602
  %v649 = vadd.f32 %v581, %v602
  %v650 = vadd.f32 %v582, %v602
  %v651 = vadd.f32 %v583, %v602
  %v652 = vadd.f32 %v584, %v602
  %v653 = vadd.f32 %v585, %v602
  %v654 = vadd.f32 %v586, %v602
  %v655 = vadd.f32 %v587, %v602
  %v656 = vadd.f32 %v588, %v602
  %v657 = vadd.f32 %v589, %v602
  %v658 = vadd.f32 %v590, %v602
  %v659 = vadd.f32 %v591, %v602
  %v660 = vadd.f32 %v592, %v602
  %v661 = vadd.f32 %v593, %v602
  %v662 = vadd.f32 %v594, %v602
  %v663 = vadd.f32 %v595, %v602
  %v664 = vadd.f32 %v596, %v602
  %v665 = vadd.f32 %v597, %v602
  %v666 = vadd.f32 %v598, %v602
  %v667 = vadd.f32 %v599, %v602
  %v668 = vmax.f32 %v604, 0.0
  %v669 = vmax.f32 %v605, 0.0
  %v670 = vmax.f32 %v606, 0.0
  %v671 = vmax.f32 %v607, 0.0
  %v672 = vmax.f32 %v608, 0.0
  %v673 = vmax.f32 %v609, 0.0
  %v674 = vmax.f32 %v610, 0.0
  %v675 = vmax.f32 %v611, 0.0
  %v676 = vmax.f32 %v612, 0.0
  %v677 = vmax.f32 %v613, 0.0
  %v678 = vmax.f32 %v614, 0.0
  %v679 = vmax.f32 %v615, 0.0
  %v680 = vmax.f32 %v616, 0.0
  %v681 = vmax.f32 %v617, 0.0
  %v682 = vmax.f32 %v618, 0.0
  %v683 = vmax.f32 %v619, 0.0
  %v684 = vmax.f32 %v620, 0.0
  %v685 = vmax.f32 %v621, 0.0
  %v686 = vmax.f32 %v622, 0.0
  %v687 = vmax.f32 %v623, 0.0
  %v688 = vmax.f32 %v624, 0.0
  %v689 = vmax.f32 %v625, 0.0
  %v690 = vmax.f32 %v626, 0.0
  %v691 = vmax.f32 %v627, 0.0
  %v692 = vmax.f32 %v628, 0.0
  %v693 = vmax.f32 %v629, 0.0
  %v694 = vmax.f32 %v630, 0.0
  %v695 = vmax.f32 %v631, 0.0
  %v696 = vmax.f32 %v632, 0.0
  %v697 = vmax.f32 %v633, 0.0
  %v698 = vmax.f32 %v634, 0.0
  %v699 = vmax.f32 %v635, 0.0
  %v700 = vmax.f32 %v636, 0.0
  %v701 = vmax.f32 %v637, 0.0
  %v702 = vmax.f32 %v638, 0.0
  %v703 = vmax.f32 %v639, 0.0
  %v704 = vmax.f32 %v640, 0.0
  %v705 = vmax.f32 %v641, 0.0
  %v706 = vmax.f32 %v642, 0.0
  %v707 = vmax.f32 %v643, 0.0
  %v708 = vmax.f32 %v644, 0.0
  %v709 = vmax.f32 %v645, 0.0
  %v710 = vmax.f32 %v646, 0.0
  %v711 = vmax.f32 %v647, 0.0
  %v712 = vmax.f32 %v648, 0.0
  %v713 = vmax.f32 %v649, 0.0
  %v714 = vmax.f32 %v650, 0.0
  %v715 = vmax.f32 %v651, 0.0
  %v716 = vmax.f32 %v652, 0.0
  %v717 = vmax.f32 %v653, 0.0
  %v718 = vmax.f32 %v654, 0.0
  %v719 = vmax.f32 %v655, 0.0
  %v720 = vmax.f32 %v656, 0.0
  %v721 = vmax.f32 %v657, 0.0
  %v722 = vmax.f32 %v658, 0.0
  %v723 = vmax.f32 %v659, 0.0
  %v724 = vmax.f32 %v660, 0.0
  %v725 = vmax.f32 %v661, 0.0
  %v726 = vmax.f32 %v662, 0.0
  %v727 = vmax.f32 %v663, 0.0
  %v728 = vmax.f32 %v664, 0.0
  %v729 = vmax.f32 %v665, 0.0
  %v730 = vmax.f32 %v666, 0.0
  %v731 = vmax.f32 %v667, 0.0
  %v732 = vmax.f32 %v668, %v676
  %v733 = vmax.f32 %v732, %v684
  %v734 = vmax.f32 %v733, %v692
  %v735 = vmax.f32 %v669, %v677
  %v736 = vmax.f32 %v735, %v685
  %v737 = vmax.f32 %v736, %v693
  %v738 = vmax.f32 %v670, %v678
  %v739 = vmax.f32 %v738, %v686
  %v740 = vmax.f32 %v739, %v694
  %v741 = vmax.f32 %v671, %v679
  %v742 = vmax.f32 %v741, %v687
  %v743 = vmax.f32 %v742, %v695
  %v744 = vmax.f32 %v672, %v680
  %v745 = vmax.f32 %v744, %v688
  %v746 = vmax.f32 %v745, %v696
  %v747 = vmax.f32 %v673, %v681
  %v748 = vmax.f32 %v747, %v689
  %v749 = vmax.f32 %v748, %v697
  %v750 = vmax.f32 %v674, %v682
  %v751 = vmax.f32 %v750, %v690
  %v752 = vmax.f32 %v751, %v698
  %v753 = vmax.f32 %v675, %v683
  %v754 = vmax.f32 %v753, %v691
  %v755 = vmax.f32 %v754, %v699
  %v756 = vmax.f32 %v700, %v708
  %v757 = vmax.f32 %v756, %v716
  %v758 = vmax.f32 %v757, %v724
  %v759 = vmax.f32 %v701, %v709
  %v760 = vmax.f32 %v759, %v717
  %v761 = vmax.f32 %v760, %v725
  %v762 = vmax.f32 %v702, %v710
  %v763 = vmax.f32 %v762, %v718
  %v764 = vmax.f32 %v763, %v726
  %v765 = vmax.f32 %v703, %v711
  %v766 = vmax.f32 %v765, %v719
  %v767 = vmax.f32 %v766, %v727
  %v768 = vmax.f32 %v704, %v712
  %v769 = vmax.f32 %v768, %v720
  %v770 = vmax.f32 %v769, %v728
  %v771 = vmax.f32 %v705, %v713
  %v772 = vmax.f32 %v771, %v721
  %v773 = vmax.f32 %v772, %v729
  %v774 = vmax.f32 %v706, %v714
  %v775 = vmax.f32 %v774, %v722
  %v776 = vmax.f32 %v775, %v730
  %v777 = vmax.f32 %v707, %v715
  %v778 = vmax.f32 %v777, %v723
  %v779 = vmax.f32 %v778, %v731
  %v780 = vpack.c.bf16 %v734, %v734
  %v781 = vpack.c.bf16 %v737, %v737
  %v782 = vpack.c.bf16 %v740, %v740
  %v783 = vpack.c.bf16 %v743, %v743
  %v784 = vpack.c.bf16 %v746, %v746
  %v785 = vpack.c.bf16 %v749, %v749
  %v786 = vpack.c.bf16 %v752, %v752
  %v787 = vpack.c.bf16 %v755, %v755
  %v788 = vpack.c.bf16 %v758, %v758
  %v789 = vpack.c.bf16 %v761, %v761
  %v790 = vpack.c.bf16 %v764, %v764
  %v791 = vpack.c.bf16 %v767, %v767
  %v792 = vpack.c.bf16 %v770, %v770
  %v793 = vpack.c.bf16 %v773, %v773
  %v794 = vpack.c.bf16 %v776, %v776
  %v795 = vpack.c.bf16 %v779, %v779
  %796 = vst [vmem:[%s4] sm:$0xf] %v780
  %797 = vst [vmem:[%s4 + $0x4] sm:$0xf] %v781
  %798 = vst [vmem:[%s4 + $0x8] sm:$0xf] %v782
  %799 = vst [vmem:[%s4 + $0xc] sm:$0xf] %v783
  %800 = vst [vmem:[%s4 + $0x10] sm:$0xf] %v784
  %801 = vst [vmem:[%s4 + $0x14] sm:$0xf] %v785
  %802 = vst [vmem:[%s4 + $0x18] sm:$0xf] %v786
  %803 = vst [vmem:[%s4 + $0x1c] sm:$0xf] %v787
  %804 = vst [vmem:[%s4 + $0x20] sm:$0xf] %v788
  %805 = vst [vmem:[%s4 + $0x24] sm:$0xf] %v789
  %806 = vst [vmem:[%s4 + $0x28] sm:$0xf] %v790
  %807 = vst [vmem:[%s4 + $0x2c] sm:$0xf] %v791
  %808 = vst [vmem:[%s4 + $0x30] sm:$0xf] %v792
  %809 = vst [vmem:[%s4 + $0x34] sm:$0xf] %v793
  %810 = vst [vmem:[%s4 + $0x38] sm:$0xf] %v794
  %811 = vst [vmem:[%s4 + $0x3c] sm:$0xf] %v795
  // Predicated region
  $region18: #{block_forward.3} parent=0 // pred_check
    _
  $region19: #{block_forward.3} parent=0 // pred_check_branch
    %813 = sbr.rel (0) target = $region21
  $region20: #{block_forward.3} parent=0 // pred_region
    _
  $region21: #{block_forward.3} parent=0 // pred_fallthru
    _
  // Predicated region
  $region22: #{block_forward.3} parent=0 // pred_check
    _
  $region23: #{block_forward.3} parent=0 // pred_check_branch
    %815 = sbr.rel (0) target = $region25
  $region24: #{block_forward.3} parent=0 // pred_region
    _
  $region25: #{block_forward.3} parent=0 // pred_fallthru
    _

</llo_original>
